<compile_context>
chip_gen: v7x
topology: tpu7x:2x2x1
jax: 0.10.0
libtpu: 0.0.40
codegen_flags: <defaults>
</compile_context>

<pallas_src>
import functools

import jax
import jax.numpy as jnp
from jax import lax
from jax.experimental import pallas as pl
from jax.experimental.pallas import tpu as pltpu


def _sigmoid(x, approx=False):
    denom = 1.0 + jnp.exp(-x)
    if approx:
        # Route the divide to the (otherwise idle) EUP reciprocal slot.
        return pl.reciprocal(denom, approx=True)
    return 1.0 / denom


def _silu(x, approx=False):
    return x * _sigmoid(x, approx)


def _softplus(x):
    # numerically stable softplus (same formula in kernel + reference)
    return jnp.maximum(x, 0.0) + jnp.log1p(jnp.exp(-jnp.abs(x)))


def mamba_kernel(x_ref,
                 wi_x_ref, bi_x_ref, wi_r_ref, bi_r_ref,
                 wc_ref, bc_ref,
                 wd_ref, bd_ref,
                 wb_ref, bb_ref, wcc_ref, bcc_ref,
                 na_ref, dparam_ref, wo_ref, bo_ref,
                 out_ref,
                 state_ref, halo_ref, u_s, dt_s, b_s, c_s, y_s,
                 *, d_inner, d_state, d_conv, lt, chunk, approx_silu):
    l_idx = pl.program_id(1)

    # ---- reset cross-tile carries at the first sequence tile of a batch ----
    @pl.when(l_idx == 0)
    def _():
        state_ref[...] = jnp.zeros_like(state_ref)
        halo_ref[...] = jnp.zeros_like(halo_ref)

    x = x_ref[0]                                    # (lt, d_model), f32
    xm = x.astype(wi_x_ref.dtype)

    # ---- in_proj, pre-split into x-branch and residual branch --------------
    xi = jnp.dot(xm, wi_x_ref[...],
                 preferred_element_type=jnp.float32) + bi_x_ref[...]
    res = jnp.dot(xm, wi_r_ref[...],
                  preferred_element_type=jnp.float32) + bi_r_ref[...]

    # ---- causal depthwise conv (channels-last) with cross-tile halo --------
    # ext = [ 8-row halo slab (last d_conv-1 rows meaningful) | xi ]
    ext = jnp.concatenate([halo_ref[...], xi], axis=0)      # (lt+8, d_inner)
    wc = wc_ref[...]                                        # (d_conv, d_inner)
    acc = jnp.broadcast_to(bc_ref[...], (lt, d_inner))
    for k in range(d_conv):
        off_k = k + 9 - d_conv          # ext row feeding output row 0 for tap k
        # TODO(synk): these shifted taps could use pltpu.roll (XLU slot) instead
        # of static shifted slices; kept as slices for lowering portability —
        # the (d_conv-1) small per-tile relayouts are off the critical path.
        tap = xi if off_k == 8 else ext[off_k:off_k + lt, :]
        acc = acc + wc[k:k + 1, :] * tap
    xc = _silu(acc, approx_silu)                            # (lt, d_inner)

    # save last (d_conv-1) xi rows as next tile's halo (after ext was read)
    if d_conv > 1:
        halo_ref[pl.ds(9 - d_conv, d_conv - 1), :] = xi[lt - (d_conv - 1):, :]

    # ---- x_proj (pre-split) with dt_proj folded into the delta branch ------
    xcm = xc.astype(wd_ref.dtype)
    delta = _softplus(jnp.dot(xcm, wd_ref[...],
                              preferred_element_type=jnp.float32) + bd_ref[...])
    Bm = jnp.dot(xcm, wb_ref[...],
                 preferred_element_type=jnp.float32) + bb_ref[...]
    Cm = jnp.dot(xcm, wcc_ref[...],
                 preferred_element_type=jnp.float32) + bcc_ref[...]

    u_s[...] = xc
    dt_s[...] = delta
    b_s[...] = Bm
    c_s[...] = Cm

    # ---- chunked selective scan (d_inner on lanes, d_state on sublanes) ----
    negA = na_ref[...]                      # (d_state, d_inner) == (-exp(A)).T

    def chunk_body(c, state):
        off = pl.multiple_of(c * chunk, chunk)
        d_c = dt_s[pl.ds(off, chunk), :]                    # (T, d_inner)
        du_c = d_c * u_s[pl.ds(off, chunk), :]              # (T, d_inner)
        b_ct = b_s[pl.ds(off, chunk), :].T                  # (d_state, T)
        c_ct = c_s[pl.ds(off, chunk), :].T                  # (d_state, T)
        s = state
        y_rows = []
        # Statically unrolled recurrence. dA_t / dBu_t do not depend on the
        # carried state, so the scheduler overlaps their exp/broadcasts with
        # the serial multiply-add chain without holding a whole chunk of
        # (d_state, d_inner) temporaries live.
        for t in range(chunk):
            dA_t = jnp.exp(d_c[t:t + 1, :] * negA)          # (d_state, d_inner)
            dBu_t = b_ct[:, t:t + 1] * du_c[t:t + 1, :]     # (d_state, d_inner)
            s = dA_t * s + dBu_t
            y_rows.append(jnp.sum(s * c_ct[:, t:t + 1], axis=0, keepdims=True))
        y_s[pl.ds(off, chunk), :] = jnp.concatenate(y_rows, axis=0)
        return s

    state_ref[...] = lax.fori_loop(0, lt // chunk, chunk_body, state_ref[...])

    # ---- skip connection, gating, out_proj (lane-dense padded output) ------
    y = y_s[...] + dparam_ref[...] * xc
    y = y * _silu(res, approx_silu)
    out = jnp.dot(y.astype(wo_ref.dtype), wo_ref[...],
                  preferred_element_type=jnp.float32) + bo_ref[...]
    out_ref[0] = out


def mamba_block_pallas(x, p, *, d_state, d_conv, lt_tile=None, chunk=8,
                       compute_dtype=jnp.float32, use_approx_silu=False):
    """MambaBlock forward. compute_dtype=jnp.bfloat16 + use_approx_silu=True is
    the production-throughput configuration (not bit-exact vs f32)."""
    B, L, d_model = x.shape
    d_inner = p["wc_t"].shape[1]
    f32 = jnp.float32

    # pad the sequence to a multiple of 8 (causal ops => padded tail is inert)
    l_pad = ((L + 7) // 8) * 8
    if l_pad != L:
        x = jnp.pad(x, ((0, 0), (0, l_pad - L), (0, 0)))

    # sequence tile: largest "nice" divisor of the padded length
    if lt_tile is None:
        lt_tile = next(c for c in (256, 128, 64, 32, 16, 8) if l_pad % c == 0)
    assert l_pad % lt_tile == 0 and lt_tile % chunk == 0 and d_conv - 1 <= 8
    n_lt = l_pad // lt_tile

    cd = compute_dtype
    mm = lambda a: a.astype(cd)      # matmul-operand cast (bf16 helps v5e/v6e/v7x MXU)

    # -- pre-split in_proj / x_proj so matmul outputs are lane-contiguous ----
    wi_t, bi = p["wi_t"], p["bi"]
    wi_x, wi_r = wi_t[:, :d_inner], wi_t[:, d_inner:]
    bi_x, bi_r = bi[:, :d_inner], bi[:, d_inner:]

    wx_t, bx = p["wx_t"], p["bx"]
    wx_d = wx_t[:, :d_inner]
    wx_b = wx_t[:, d_inner:d_inner + d_state]
    wx_c = wx_t[:, d_inner + d_state:]
    bx_d = bx[:, :d_inner]
    bx_b = bx[:, d_inner:d_inner + d_state]
    bx_c = bx[:, d_inner + d_state:]

    # -- fold dt_proj into the delta branch of x_proj (linear-map composition)
    w_delta = wx_d @ p["wdt_t"]
    b_delta = bx_d @ p["wdt_t"] + p["bdt"]

    # -- SSM transition, pre-negated/exponentiated and transposed so d_inner
    #    sits on the lane axis inside the kernel
    neg_a_t = (-jnp.exp(p["A"].astype(f32))).T               # (d_state, d_inner)

    # -- pad out_proj to a lane-dense (multiple-of-128) output width ---------
    d_out = ((d_model + 127) // 128) * 128
    wo, bo = p["wo_t"], p["bo"]
    if d_out != d_model:
        wo = jnp.pad(wo, ((0, 0), (0, d_out - d_model)))
        bo = jnp.pad(bo, ((0, 0), (0, d_out - d_model)))

    args = (x,
            mm(wi_x), bi_x, mm(wi_r), bi_r,
            p["wc_t"], p["bc"],
            mm(w_delta), b_delta,
            mm(wx_b), bx_b, mm(wx_c), bx_c,
            neg_a_t, p["D"],
            mm(wo), bo)

    def full(a):
        nd = a.ndim
        return pl.BlockSpec(a.shape, lambda b, l, _nd=nd: (0,) * _nd)

    in_specs = ([pl.BlockSpec((1, lt_tile, d_model), lambda b, l: (b, l, 0))]
                + [full(a) for a in args[1:]])
    out_specs = pl.BlockSpec((1, lt_tile, d_out), lambda b, l: (b, l, 0))

    scratch = [
        pltpu.VMEM((d_state, d_inner), f32),    # SSM state, carried across L tiles
        pltpu.VMEM((8, d_inner), f32),          # conv halo, carried across L tiles
        pltpu.VMEM((lt_tile, d_inner), f32),    # u  (conv + SiLU output)
        pltpu.VMEM((lt_tile, d_inner), f32),    # delta
        pltpu.VMEM((lt_tile, d_state), f32),    # B
        pltpu.VMEM((lt_tile, d_state), f32),    # C
        pltpu.VMEM((lt_tile, d_inner), f32),    # y  (scan output)
    ]

    # -- explicit scoped-VMEM budget derived from the actual footprint -------
    def nbytes(a):
        return int(a.size) * jnp.dtype(a.dtype).itemsize
    weight_bytes = sum(nbytes(a) for a in args[1:])
    io_bytes = 2 * 4 * lt_tile * (d_model + d_out)            # double-buffered x/out
    scratch_bytes = 4 * (d_state * d_inner + 8 * d_inner
                         + 3 * lt_tile * d_inner + 2 * lt_tile * d_state)
    temp_bytes = 4 * (8 * lt_tile * d_inner + 4 * chunk * d_state * d_inner)
    need = 2 * (weight_bytes + io_bytes + scratch_bytes + temp_bytes)
    vmem_limit = int(min(64 * 1024 * 1024, max(32 * 1024 * 1024, need)))

    kern = functools.partial(
        mamba_kernel, d_inner=d_inner, d_state=d_state, d_conv=d_conv,
        lt=lt_tile, chunk=chunk, approx_silu=use_approx_silu)

    out = pl.pallas_call(
        kern,
        out_shape=jax.ShapeDtypeStruct((B, l_pad, d_out), f32),
        grid_spec=pltpu.PrefetchScalarGridSpec(
            num_scalar_prefetch=0,
            grid=(B, n_lt),
            in_specs=in_specs,
            out_specs=out_specs,
            scratch_shapes=scratch),
        compiler_params=pltpu.CompilerParams(
            dimension_semantics=("parallel", "arbitrary"),
            vmem_limit_bytes=vmem_limit),
    )(*args)

    return out[:, :L, :d_model]


def mamba_block_ref(x, p, *, d_inner, d_state, d_conv):
    """Pure-JAX reference mirroring the PyTorch MambaBlock.forward semantics."""
    B, L, d_model = x.shape
    xr = x @ p["wi_t"] + p["bi"]
    xi, res = xr[..., :d_inner], xr[..., d_inner:]
    xi_pad = jnp.concatenate(
        [jnp.zeros((B, d_conv - 1, d_inner), jnp.float32), xi], axis=1)
    acc = jnp.broadcast_to(p["bc"], (B, L, d_inner))
    for k in range(d_conv):
        acc = acc + xi_pad[:, k:k + L, :] * p["wc_t"][k][None, None, :]
    xc = _silu(acc)
    xp = xc @ p["wx_t"] + p["bx"]
    delta = _softplus(xp[..., :d_inner] @ p["wdt_t"] + p["bdt"])
    Bm = xp[..., d_inner:d_inner + d_state]
    Cm = xp[..., d_inner + d_state:]
    A = -jnp.exp(p["A"])

    def step(state, inp):
        d_t, u_t, B_t, C_t = inp
        dA = jnp.exp(d_t[..., None] * A)
        state = dA * state + d_t[..., None] * B_t[:, None, :] * u_t[..., None]
        y_t = jnp.sum(state * C_t[:, None, :], axis=-1)
        return state, y_t

    init = jnp.zeros((B, d_inner, d_state), jnp.float32)
    _, ys = lax.scan(step, init, (jnp.swapaxes(delta, 0, 1),
                                  jnp.swapaxes(xc, 0, 1),
                                  jnp.swapaxes(Bm, 0, 1),
                                  jnp.swapaxes(Cm, 0, 1)))
    y = jnp.swapaxes(ys, 0, 1)
    y = y + p["D"] * xc
    y = y * _silu(res)
    return y @ p["wo_t"] + p["bo"]


if __name__ == "__main__":
    d_model, d_state, d_conv, expand = 32, 16, 4, 2
    d_inner = expand * d_model
    B, L = 2, 32

    key = jax.random.PRNGKey(0)
    keys = jax.random.split(key, 13)

    def rnd(k, shape, scale=0.1):
        return (scale * jax.random.normal(k, shape)).astype(jnp.float32)

    # Deterministic synthetic parameters. Linear weights pre-transposed to
    # (in_features, out_features); depthwise conv weight as (d_conv, d_inner).
    params = {
        "wi_t":  rnd(keys[0], (d_model, 2 * d_inner)),
        "bi":    rnd(keys[1], (1, 2 * d_inner)),
        "wc_t":  rnd(keys[2], (d_conv, d_inner)),
        "bc":    rnd(keys[3], (1, d_inner)),
        "wx_t":  rnd(keys[4], (d_inner, d_inner + 2 * d_state)),
        "bx":    rnd(keys[5], (1, d_inner + 2 * d_state)),
        "wdt_t": rnd(keys[6], (d_inner, d_inner)),
        "bdt":   rnd(keys[7], (1, d_inner)),
        "A":     rnd(keys[8], (d_inner, d_state), 0.5),
        "D":     rnd(keys[9], (1, d_inner), 0.5),
        "wo_t":  rnd(keys[10], (d_inner, d_model)),
        "bo":    rnd(keys[11], (1, d_model)),
    }
    x = rnd(keys[12], (B, L, d_model), 1.0)

    ref = mamba_block_ref(x, params, d_inner=d_inner, d_state=d_state,
                          d_conv=d_conv)

    # (a) multi-tile path: exercises cross-tile SSM-state + conv-halo carries
    out_tiled = jax.block_until_ready(
        mamba_block_pallas(x, params, d_state=d_state, d_conv=d_conv,
                           lt_tile=16))
    # (b) auto tile selection (single sequence tile here, 4 scan chunks)
    out_auto = jax.block_until_ready(
        mamba_block_pallas(x, params, d_state=d_state, d_conv=d_conv))

    for name, out in (("tiled", out_tiled), ("auto", out_auto)):
        assert out.shape == (B, L, d_model), (name, out.shape)
        err = float(jnp.max(jnp.abs(out - ref)))
        if not jnp.allclose(out, ref, atol=1e-4, rtol=1e-4):
            raise AssertionError(
                f"{name}: mismatch vs reference, max abs err = {err}")

    # (c) production-throughput flags (bf16 MXU inputs + EUP approx reciprocal
    #     for SiLU): mathematically equivalent but not bit-exact -> loose check.
    out_fast = jax.block_until_ready(
        mamba_block_pallas(x, params, d_state=d_state, d_conv=d_conv,
                           compute_dtype=jnp.bfloat16, use_approx_silu=True))
    err_fast = float(jnp.max(jnp.abs(out_fast - ref)))
    if not jnp.allclose(out_fast, ref, atol=5e-2, rtol=5e-2):
        raise AssertionError(
            f"bf16/approx path drifted too far, max abs err = {err_fast}")

    print("KERNEL_OK")
</pallas_src>

<mosaic_0001>
module attributes {stable_mosaic.version = 11 : i64} {
  func.func @mamba_kernel(%arg0: i32, %arg1: i32, %arg2: memref<1x16x32xf32, #tpu.memory_space<vmem>>, %arg3: memref<32x64xf32, #tpu.memory_space<vmem>>, %arg4: memref<1x64xf32, #tpu.memory_space<vmem>>, %arg5: memref<32x64xf32, #tpu.memory_space<vmem>>, %arg6: memref<1x64xf32, #tpu.memory_space<vmem>>, %arg7: memref<4x64xf32, #tpu.memory_space<vmem>>, %arg8: memref<1x64xf32, #tpu.memory_space<vmem>>, %arg9: memref<64x64xf32, #tpu.memory_space<vmem>>, %arg10: memref<1x64xf32, #tpu.memory_space<vmem>>, %arg11: memref<64x16xf32, #tpu.memory_space<vmem>>, %arg12: memref<1x16xf32, #tpu.memory_space<vmem>>, %arg13: memref<64x16xf32, #tpu.memory_space<vmem>>, %arg14: memref<1x16xf32, #tpu.memory_space<vmem>>, %arg15: memref<16x64xf32, #tpu.memory_space<vmem>>, %arg16: memref<1x64xf32, #tpu.memory_space<vmem>>, %arg17: memref<64x128xf32, #tpu.memory_space<vmem>>, %arg18: memref<1x128xf32, #tpu.memory_space<vmem>>, %arg19: memref<1x16x128xf32, #tpu.memory_space<vmem>>, %arg20: memref<16x64xf32, #tpu.memory_space<vmem>>, %arg21: memref<8x64xf32, #tpu.memory_space<vmem>>, %arg22: memref<16x64xf32, #tpu.memory_space<vmem>>, %arg23: memref<16x64xf32, #tpu.memory_space<vmem>>, %arg24: memref<16x16xf32, #tpu.memory_space<vmem>>, %arg25: memref<16x16xf32, #tpu.memory_space<vmem>>, %arg26: memref<16x64xf32, #tpu.memory_space<vmem>>) attributes {dimension_semantics = [#tpu.dimension_semantics<parallel>, #tpu.dimension_semantics<arbitrary>], iteration_bounds = array<i64: 2, 2>, scalar_prefetch = 0 : i64, scratch_operands = 7 : i64, tpu.core_type = #tpu.core_type<tc>, window_params = [{transform_indices = @transform_0, window_bounds = array<i64: 1, 16, 32>}, {pipeline_mode = #tpu.pipeline_mode<synchronous>, transform_indices = @transform_1, window_bounds = array<i64: 32, 64>}, {pipeline_mode = #tpu.pipeline_mode<synchronous>, transform_indices = @transform_2, window_bounds = array<i64: 1, 64>}, {pipeline_mode = #tpu.pipeline_mode<synchronous>, transform_indices = @transform_3, window_bounds = array<i64: 32, 64>}, {pipeline_mode = #tpu.pipeline_mode<synchronous>, transform_indices = @transform_4, window_bounds = array<i64: 1, 64>}, {pipeline_mode = #tpu.pipeline_mode<synchronous>, transform_indices = @transform_5, window_bounds = array<i64: 4, 64>}, {pipeline_mode = #tpu.pipeline_mode<synchronous>, transform_indices = @transform_6, window_bounds = array<i64: 1, 64>}, {pipeline_mode = #tpu.pipeline_mode<synchronous>, transform_indices = @transform_7, window_bounds = array<i64: 64, 64>}, {pipeline_mode = #tpu.pipeline_mode<synchronous>, transform_indices = @transform_8, window_bounds = array<i64: 1, 64>}, {pipeline_mode = #tpu.pipeline_mode<synchronous>, transform_indices = @transform_9, window_bounds = array<i64: 64, 16>}, {pipeline_mode = #tpu.pipeline_mode<synchronous>, transform_indices = @transform_10, window_bounds = array<i64: 1, 16>}, {pipeline_mode = #tpu.pipeline_mode<synchronous>, transform_indices = @transform_11, window_bounds = array<i64: 64, 16>}, {pipeline_mode = #tpu.pipeline_mode<synchronous>, transform_indices = @transform_12, window_bounds = array<i64: 1, 16>}, {pipeline_mode = #tpu.pipeline_mode<synchronous>, transform_indices = @transform_13, window_bounds = array<i64: 16, 64>}, {pipeline_mode = #tpu.pipeline_mode<synchronous>, transform_indices = @transform_14, window_bounds = array<i64: 1, 64>}, {pipeline_mode = #tpu.pipeline_mode<synchronous>, transform_indices = @transform_15, window_bounds = array<i64: 64, 128>}, {pipeline_mode = #tpu.pipeline_mode<synchronous>, transform_indices = @transform_16, window_bounds = array<i64: 1, 128>}, {transform_indices = @transform_17, window_bounds = array<i64: 1, 16, 128>}]} {
    %c0_i32 = arith.constant 0 : i32
    %0 = arith.cmpi eq, %arg1, %c0_i32 : i32
    %1 = arith.extui %0 : i1 to i32
    %c0_i32_0 = arith.constant 0 : i32
    %2 = arith.cmpi ne, %1, %c0_i32_0 : i32
    scf.if %2 {
      %cst_70 = arith.constant 0.000000e+00 : f32
      %104 = vector.broadcast %cst_70 : f32 to vector<16x64xf32>
      %c0_71 = arith.constant 0 : index
      %c0_72 = arith.constant 0 : index
      %105 = vector.load %arg20[%c0_71, %c0_72] : memref<16x64xf32, #tpu.memory_space<vmem>>, vector<16x64xf32>
      tpu.vector_store %arg20[%c0_71, %c0_72], %104 {strides = array<i32>} : memref<16x64xf32, #tpu.memory_space<vmem>>, vector<16x64xf32>,
      %cst_73 = arith.constant 0.000000e+00 : f32
      %106 = vector.broadcast %cst_73 : f32 to vector<8x64xf32>
      %c0_74 = arith.constant 0 : index
      %c0_75 = arith.constant 0 : index
      %107 = vector.load %arg21[%c0_74, %c0_75] : memref<8x64xf32, #tpu.memory_space<vmem>>, vector<8x64xf32>
      tpu.vector_store %arg21[%c0_74, %c0_75], %106 {strides = array<i32>} : memref<8x64xf32, #tpu.memory_space<vmem>>, vector<8x64xf32>,
    } else {
    }
    %c0 = arith.constant 0 : index
    %c0_1 = arith.constant 0 : index
    %c0_2 = arith.constant 0 : index
    %3 = vector.load %arg2[%c0, %c0_1, %c0_2] : memref<1x16x32xf32, #tpu.memory_space<vmem>>, vector<1x16x32xf32>
    %4 = vector.shape_cast %3 : vector<1x16x32xf32> to vector<16x32xf32>
    %c0_3 = arith.constant 0 : index
    %c0_4 = arith.constant 0 : index
    %5 = vector.load %arg3[%c0_3, %c0_4] : memref<32x64xf32, #tpu.memory_space<vmem>>, vector<32x64xf32>
    %cst = arith.constant dense<0.000000e+00> : vector<16x64xf32>
    %6 = tpu.matmul %4, %5, %cst {dimension_numbers = #tpu.dot_dimension_numbers<[1], [0], [0], [1], [0, 0, 1, 1], [], []>} : vector<16x32xf32>, vector<32x64xf32>, vector<16x64xf32> -> vector<16x64xf32>
    %c0_5 = arith.constant 0 : index
    %c0_6 = arith.constant 0 : index
    %7 = vector.load %arg4[%c0_5, %c0_6] : memref<1x64xf32, #tpu.memory_space<vmem>>, vector<1x64xf32>
    %8 = vector.broadcast %7 : vector<1x64xf32> to vector<16x64xf32>
    %9 = arith.addf %6, %8 : vector<16x64xf32>
    %c0_7 = arith.constant 0 : index
    %c0_8 = arith.constant 0 : index
    %10 = vector.load %arg5[%c0_7, %c0_8] : memref<32x64xf32, #tpu.memory_space<vmem>>, vector<32x64xf32>
    %cst_9 = arith.constant dense<0.000000e+00> : vector<16x64xf32>
    %11 = tpu.matmul %4, %10, %cst_9 {dimension_numbers = #tpu.dot_dimension_numbers<[1], [0], [0], [1], [0, 0, 1, 1], [], []>} : vector<16x32xf32>, vector<32x64xf32>, vector<16x64xf32> -> vector<16x64xf32>
    %c0_10 = arith.constant 0 : index
    %c0_11 = arith.constant 0 : index
    %12 = vector.load %arg6[%c0_10, %c0_11] : memref<1x64xf32, #tpu.memory_space<vmem>>, vector<1x64xf32>
    %13 = vector.broadcast %12 : vector<1x64xf32> to vector<16x64xf32>
    %14 = arith.addf %11, %13 : vector<16x64xf32>
    %c0_12 = arith.constant 0 : index
    %c0_13 = arith.constant 0 : index
    %15 = vector.load %arg21[%c0_12, %c0_13] : memref<8x64xf32, #tpu.memory_space<vmem>>, vector<8x64xf32>
    %16 = tpu.concatenate %15, %9 in 0 : vector<8x64xf32>, vector<16x64xf32> -> vector<24x64xf32>
    %c0_14 = arith.constant 0 : index
    %c0_15 = arith.constant 0 : index
    %17 = vector.load %arg7[%c0_14, %c0_15] : memref<4x64xf32, #tpu.memory_space<vmem>>, vector<4x64xf32>
    %c0_16 = arith.constant 0 : index
    %c0_17 = arith.constant 0 : index
    %18 = vector.load %arg8[%c0_16, %c0_17] : memref<1x64xf32, #tpu.memory_space<vmem>>, vector<1x64xf32>
    %19 = vector.shape_cast %18 : vector<1x64xf32> to vector<1x64xf32>
    %20 = vector.broadcast %19 : vector<1x64xf32> to vector<16x64xf32>
    %21 = vector.extract_strided_slice %16 {offsets = [5, 0], sizes = [16, 64], strides = [1, 1]} : vector<24x64xf32> to vector<16x64xf32>
    %22 = vector.extract_strided_slice %17 {offsets = [0, 0], sizes = [1, 64], strides = [1, 1]} : vector<4x64xf32> to vector<1x64xf32>
    %23 = vector.broadcast %22 : vector<1x64xf32> to vector<16x64xf32>
    %24 = arith.mulf %23, %21 : vector<16x64xf32>
    %25 = arith.addf %20, %24 : vector<16x64xf32>
    %26 = vector.extract_strided_slice %16 {offsets = [6, 0], sizes = [16, 64], strides = [1, 1]} : vector<24x64xf32> to vector<16x64xf32>
    %27 = vector.extract_strided_slice %17 {offsets = [1, 0], sizes = [1, 64], strides = [1, 1]} : vector<4x64xf32> to vector<1x64xf32>
    %28 = vector.broadcast %27 : vector<1x64xf32> to vector<16x64xf32>
    %29 = arith.mulf %28, %26 : vector<16x64xf32>
    %30 = arith.addf %25, %29 : vector<16x64xf32>
    %31 = vector.extract_strided_slice %16 {offsets = [7, 0], sizes = [16, 64], strides = [1, 1]} : vector<24x64xf32> to vector<16x64xf32>
    %32 = vector.extract_strided_slice %17 {offsets = [2, 0], sizes = [1, 64], strides = [1, 1]} : vector<4x64xf32> to vector<1x64xf32>
    %33 = vector.broadcast %32 : vector<1x64xf32> to vector<16x64xf32>
    %34 = arith.mulf %33, %31 : vector<16x64xf32>
    %35 = arith.addf %30, %34 : vector<16x64xf32>
    %36 = vector.extract_strided_slice %17 {offsets = [3, 0], sizes = [1, 64], strides = [1, 1]} : vector<4x64xf32> to vector<1x64xf32>
    %37 = vector.broadcast %36 : vector<1x64xf32> to vector<16x64xf32>
    %38 = arith.mulf %37, %9 : vector<16x64xf32>
    %39 = arith.addf %35, %38 : vector<16x64xf32>
    %cst_18 = arith.constant 0.000000e+00 : f32
    %40 = vector.broadcast %cst_18 : f32 to vector<16x64xf32>
    %41 = arith.subf %40, %39 : vector<16x64xf32>
    %42 = math.exp %41 : vector<16x64xf32>
    %cst_19 = arith.constant 1.000000e+00 : f32
    %43 = vector.broadcast %cst_19 : f32 to vector<16x64xf32>
    %44 = arith.addf %43, %42 : vector<16x64xf32>
    %cst_20 = arith.constant 1.000000e+00 : f32
    %45 = vector.broadcast %cst_20 : f32 to vector<16x64xf32>
    %46 = arith.divf %45, %44 : vector<16x64xf32>
    %47 = arith.mulf %39, %46 : vector<16x64xf32>
    %48 = vector.extract_strided_slice %9 {offsets = [13, 0], sizes = [3, 64], strides = [1, 1]} : vector<16x64xf32> to vector<3x64xf32>
    %c5 = arith.constant 5 : index
    %c0_21 = arith.constant 0 : index
    %49 = vector.load %arg21[%c5, %c0_21] : memref<8x64xf32, #tpu.memory_space<vmem>>, vector<3x64xf32>
    tpu.vector_store %arg21[%c5, %c0_21], %48 {strides = array<i32>} : memref<8x64xf32, #tpu.memory_space<vmem>>, vector<3x64xf32>,
    %c0_22 = arith.constant 0 : index
    %c0_23 = arith.constant 0 : index
    %50 = vector.load %arg9[%c0_22, %c0_23] : memref<64x64xf32, #tpu.memory_space<vmem>>, vector<64x64xf32>
    %cst_24 = arith.constant dense<0.000000e+00> : vector<16x64xf32>
    %51 = tpu.matmul %47, %50, %cst_24 {dimension_numbers = #tpu.dot_dimension_numbers<[1], [0], [0], [1], [0, 0, 1, 1], [], []>} : vector<16x64xf32>, vector<64x64xf32>, vector<16x64xf32> -> vector<16x64xf32>
    %c0_25 = arith.constant 0 : index
    %c0_26 = arith.constant 0 : index
    %52 = vector.load %arg10[%c0_25, %c0_26] : memref<1x64xf32, #tpu.memory_space<vmem>>, vector<1x64xf32>
    %53 = vector.broadcast %52 : vector<1x64xf32> to vector<16x64xf32>
    %54 = arith.addf %51, %53 : vector<16x64xf32>
    %cst_27 = arith.constant 0.000000e+00 : f32
    %55 = vector.broadcast %cst_27 : f32 to vector<16x64xf32>
    %56 = arith.maximumf %54, %55 : vector<16x64xf32>
    %57 = math.absf %54 : vector<16x64xf32>
    %cst_28 = arith.constant 0.000000e+00 : f32
    %58 = vector.broadcast %cst_28 : f32 to vector<16x64xf32>
    %59 = arith.subf %58, %57 : vector<16x64xf32>
    %60 = math.exp %59 : vector<16x64xf32>
    %61 = math.log1p %60 : vector<16x64xf32>
    %62 = arith.addf %56, %61 : vector<16x64xf32>
    %c0_29 = arith.constant 0 : index
    %c0_30 = arith.constant 0 : index
    %63 = vector.load %arg11[%c0_29, %c0_30] : memref<64x16xf32, #tpu.memory_space<vmem>>, vector<64x16xf32>
    %cst_31 = arith.constant dense<0.000000e+00> : vector<16x16xf32>
    %64 = tpu.matmul %47, %63, %cst_31 {dimension_numbers = #tpu.dot_dimension_numbers<[1], [0], [0], [1], [0, 0, 1, 1], [], []>} : vector<16x64xf32>, vector<64x16xf32>, vector<16x16xf32> -> vector<16x16xf32>
    %c0_32 = arith.constant 0 : index
    %c0_33 = arith.constant 0 : index
    %65 = vector.load %arg12[%c0_32, %c0_33] : memref<1x16xf32, #tpu.memory_space<vmem>>, vector<1x16xf32>
    %66 = vector.broadcast %65 : vector<1x16xf32> to vector<16x16xf32>
    %67 = arith.addf %64, %66 : vector<16x16xf32>
    %c0_34 = arith.constant 0 : index
    %c0_35 = arith.constant 0 : index
    %68 = vector.load %arg13[%c0_34, %c0_35] : memref<64x16xf32, #tpu.memory_space<vmem>>, vector<64x16xf32>
    %cst_36 = arith.constant dense<0.000000e+00> : vector<16x16xf32>
    %69 = tpu.matmul %47, %68, %cst_36 {dimension_numbers = #tpu.dot_dimension_numbers<[1], [0], [0], [1], [0, 0, 1, 1], [], []>} : vector<16x64xf32>, vector<64x16xf32>, vector<16x16xf32> -> vector<16x16xf32>
    %c0_37 = arith.constant 0 : index
    %c0_38 = arith.constant 0 : index
    %70 = vector.load %arg14[%c0_37, %c0_38] : memref<1x16xf32, #tpu.memory_space<vmem>>, vector<1x16xf32>
    %71 = vector.broadcast %70 : vector<1x16xf32> to vector<16x16xf32>
    %72 = arith.addf %69, %71 : vector<16x16xf32>
    %c0_39 = arith.constant 0 : index
    %c0_40 = arith.constant 0 : index
    %73 = vector.load %arg22[%c0_39, %c0_40] : memref<16x64xf32, #tpu.memory_space<vmem>>, vector<16x64xf32>
    tpu.vector_store %arg22[%c0_39, %c0_40], %47 {strides = array<i32>} : memref<16x64xf32, #tpu.memory_space<vmem>>, vector<16x64xf32>,
    %c0_41 = arith.constant 0 : index
    %c0_42 = arith.constant 0 : index
    %74 = vector.load %arg23[%c0_41, %c0_42] : memref<16x64xf32, #tpu.memory_space<vmem>>, vector<16x64xf32>
    tpu.vector_store %arg23[%c0_41, %c0_42], %62 {strides = array<i32>} : memref<16x64xf32, #tpu.memory_space<vmem>>, vector<16x64xf32>,
    %c0_43 = arith.constant 0 : index
    %c0_44 = arith.constant 0 : index
    %75 = vector.load %arg24[%c0_43, %c0_44] : memref<16x16xf32, #tpu.memory_space<vmem>>, vector<16x16xf32>
    tpu.vector_store %arg24[%c0_43, %c0_44], %67 {strides = array<i32>} : memref<16x16xf32, #tpu.memory_space<vmem>>, vector<16x16xf32>,
    %c0_45 = arith.constant 0 : index
    %c0_46 = arith.constant 0 : index
    %76 = vector.load %arg25[%c0_45, %c0_46] : memref<16x16xf32, #tpu.memory_space<vmem>>, vector<16x16xf32>
    tpu.vector_store %arg25[%c0_45, %c0_46], %72 {strides = array<i32>} : memref<16x16xf32, #tpu.memory_space<vmem>>, vector<16x16xf32>,
    %c0_47 = arith.constant 0 : index
    %c0_48 = arith.constant 0 : index
    %77 = vector.load %arg15[%c0_47, %c0_48] : memref<16x64xf32, #tpu.memory_space<vmem>>, vector<16x64xf32>
    %c0_49 = arith.constant 0 : index
    %c0_50 = arith.constant 0 : index
    %78 = vector.load %arg20[%c0_49, %c0_50] : memref<16x64xf32, #tpu.memory_space<vmem>>, vector<16x64xf32>
    %c0_i32_51 = arith.constant 0 : i32
    %c2_i32 = arith.constant 2 : i32
    %79 = arith.addi %c0_i32_51, %c2_i32 : i32
    %c1_i32 = arith.constant 1 : i32
    %80 = scf.for %arg27 = %c0_i32_51 to %79 step %c1_i32 iter_args(%arg28 = %78) -> (vector<16x64xf32>)  : i32 {
      %c8_i32 = arith.constant 8 : i32
      %104 = arith.muli %arg27, %c8_i32 : i32
      %105 = tpu.assume_multiple %104, 8 : i32
      %106 = arith.index_cast %105 : i32 to index
      %c0_70 = arith.constant 0 : index
      %107 = vector.load %arg23[%106, %c0_70] : memref<16x64xf32, #tpu.memory_space<vmem>>, vector<8x64xf32>
      %108 = arith.index_cast %105 : i32 to index
      %c0_71 = arith.constant 0 : index
      %109 = vector.load %arg22[%108, %c0_71] : memref<16x64xf32, #tpu.memory_space<vmem>>, vector<8x64xf32>
      %110 = arith.mulf %107, %109 : vector<8x64xf32>
      %111 = arith.index_cast %105 : i32 to index
      %c0_72 = arith.constant 0 : index
      %112 = vector.load %arg24[%111, %c0_72] : memref<16x16xf32, #tpu.memory_space<vmem>>, vector<8x16xf32>
      %113 = tpu.transpose %112, [1, 0] : vector<8x16xf32> -> vector<16x8xf32>
      %114 = arith.index_cast %105 : i32 to index
      %c0_73 = arith.constant 0 : index
      %115 = vector.load %arg25[%114, %c0_73] : memref<16x16xf32, #tpu.memory_space<vmem>>, vector<8x16xf32>
      %116 = tpu.transpose %115, [1, 0] : vector<8x16xf32> -> vector<16x8xf32>
      %117 = vector.extract_strided_slice %107 {offsets = [0, 0], sizes = [1, 64], strides = [1, 1]} : vector<8x64xf32> to vector<1x64xf32>
      %118 = vector.broadcast %117 : vector<1x64xf32> to vector<16x64xf32>
      %119 = arith.mulf %118, %77 : vector<16x64xf32>
      %120 = math.exp %119 : vector<16x64xf32>
      %121 = vector.extract_strided_slice %113 {offsets = [0, 0], sizes = [16, 1], strides = [1, 1]} : vector<16x8xf32> to vector<16x1xf32>
      %122 = vector.extract_strided_slice %110 {offsets = [0, 0], sizes = [1, 64], strides = [1, 1]} : vector<8x64xf32> to vector<1x64xf32>
      %123 = vector.broadcast %121 : vector<16x1xf32> to vector<16x64xf32>
      %124 = vector.broadcast %122 : vector<1x64xf32> to vector<16x64xf32>
      %125 = arith.mulf %123, %124 : vector<16x64xf32>
      %126 = arith.mulf %120, %arg28 : vector<16x64xf32>
      %127 = arith.addf %126, %125 : vector<16x64xf32>
      %128 = vector.extract_strided_slice %116 {offsets = [0, 0], sizes = [16, 1], strides = [1, 1]} : vector<16x8xf32> to vector<16x1xf32>
      %129 = vector.broadcast %128 : vector<16x1xf32> to vector<16x64xf32>
      %130 = arith.mulf %127, %129 : vector<16x64xf32>
      %cst_74 = arith.constant dense<0.000000e+00> : vector<64xf32>
      %131 = vector.multi_reduction <add>, %130, %cst_74 [0] : vector<16x64xf32> to vector<64xf32>
      %132 = vector.shape_cast %131 : vector<64xf32> to vector<1x64xf32>
      %133 = vector.extract_strided_slice %107 {offsets = [1, 0], sizes = [1, 64], strides = [1, 1]} : vector<8x64xf32> to vector<1x64xf32>
      %134 = vector.broadcast %133 : vector<1x64xf32> to vector<16x64xf32>
      %135 = arith.mulf %134, %77 : vector<16x64xf32>
      %136 = math.exp %135 : vector<16x64xf32>
      %137 = vector.extract_strided_slice %113 {offsets = [0, 1], sizes = [16, 1], strides = [1, 1]} : vector<16x8xf32> to vector<16x1xf32>
      %138 = vector.extract_strided_slice %110 {offsets = [1, 0], sizes = [1, 64], strides = [1, 1]} : vector<8x64xf32> to vector<1x64xf32>
      %139 = vector.broadcast %137 : vector<16x1xf32> to vector<16x64xf32>
      %140 = vector.broadcast %138 : vector<1x64xf32> to vector<16x64xf32>
      %141 = arith.mulf %139, %140 : vector<16x64xf32>
      %142 = arith.mulf %136, %127 : vector<16x64xf32>
      %143 = arith.addf %142, %141 : vector<16x64xf32>
      %144 = vector.extract_strided_slice %116 {offsets = [0, 1], sizes = [16, 1], strides = [1, 1]} : vector<16x8xf32> to vector<16x1xf32>
      %145 = vector.broadcast %144 : vector<16x1xf32> to vector<16x64xf32>
      %146 = arith.mulf %143, %145 : vector<16x64xf32>
      %cst_75 = arith.constant dense<0.000000e+00> : vector<64xf32>
      %147 = vector.multi_reduction <add>, %146, %cst_75 [0] : vector<16x64xf32> to vector<64xf32>
      %148 = vector.shape_cast %147 : vector<64xf32> to vector<1x64xf32>
      %149 = vector.extract_strided_slice %107 {offsets = [2, 0], sizes = [1, 64], strides = [1, 1]} : vector<8x64xf32> to vector<1x64xf32>
      %150 = vector.broadcast %149 : vector<1x64xf32> to vector<16x64xf32>
      %151 = arith.mulf %150, %77 : vector<16x64xf32>
      %152 = math.exp %151 : vector<16x64xf32>
      %153 = vector.extract_strided_slice %113 {offsets = [0, 2], sizes = [16, 1], strides = [1, 1]} : vector<16x8xf32> to vector<16x1xf32>
      %154 = vector.extract_strided_slice %110 {offsets = [2, 0], sizes = [1, 64], strides = [1, 1]} : vector<8x64xf32> to vector<1x64xf32>
      %155 = vector.broadcast %153 : vector<16x1xf32> to vector<16x64xf32>
      %156 = vector.broadcast %154 : vector<1x64xf32> to vector<16x64xf32>
      %157 = arith.mulf %155, %156 : vector<16x64xf32>
      %158 = arith.mulf %152, %143 : vector<16x64xf32>
      %159 = arith.addf %158, %157 : vector<16x64xf32>
      %160 = vector.extract_strided_slice %116 {offsets = [0, 2], sizes = [16, 1], strides = [1, 1]} : vector<16x8xf32> to vector<16x1xf32>
      %161 = vector.broadcast %160 : vector<16x1xf32> to vector<16x64xf32>
      %162 = arith.mulf %159, %161 : vector<16x64xf32>
      %cst_76 = arith.constant dense<0.000000e+00> : vector<64xf32>
      %163 = vector.multi_reduction <add>, %162, %cst_76 [0] : vector<16x64xf32> to vector<64xf32>
      %164 = vector.shape_cast %163 : vector<64xf32> to vector<1x64xf32>
      %165 = vector.extract_strided_slice %107 {offsets = [3, 0], sizes = [1, 64], strides = [1, 1]} : vector<8x64xf32> to vector<1x64xf32>
      %166 = vector.broadcast %165 : vector<1x64xf32> to vector<16x64xf32>
      %167 = arith.mulf %166, %77 : vector<16x64xf32>
      %168 = math.exp %167 : vector<16x64xf32>
      %169 = vector.extract_strided_slice %113 {offsets = [0, 3], sizes = [16, 1], strides = [1, 1]} : vector<16x8xf32> to vector<16x1xf32>
      %170 = vector.extract_strided_slice %110 {offsets = [3, 0], sizes = [1, 64], strides = [1, 1]} : vector<8x64xf32> to vector<1x64xf32>
      %171 = vector.broadcast %169 : vector<16x1xf32> to vector<16x64xf32>
      %172 = vector.broadcast %170 : vector<1x64xf32> to vector<16x64xf32>
      %173 = arith.mulf %171, %172 : vector<16x64xf32>
      %174 = arith.mulf %168, %159 : vector<16x64xf32>
      %175 = arith.addf %174, %173 : vector<16x64xf32>
      %176 = vector.extract_strided_slice %116 {offsets = [0, 3], sizes = [16, 1], strides = [1, 1]} : vector<16x8xf32> to vector<16x1xf32>
      %177 = vector.broadcast %176 : vector<16x1xf32> to vector<16x64xf32>
      %178 = arith.mulf %175, %177 : vector<16x64xf32>
      %cst_77 = arith.constant dense<0.000000e+00> : vector<64xf32>
      %179 = vector.multi_reduction <add>, %178, %cst_77 [0] : vector<16x64xf32> to vector<64xf32>
      %180 = vector.shape_cast %179 : vector<64xf32> to vector<1x64xf32>
      %181 = vector.extract_strided_slice %107 {offsets = [4, 0], sizes = [1, 64], strides = [1, 1]} : vector<8x64xf32> to vector<1x64xf32>
      %182 = vector.broadcast %181 : vector<1x64xf32> to vector<16x64xf32>
      %183 = arith.mulf %182, %77 : vector<16x64xf32>
      %184 = math.exp %183 : vector<16x64xf32>
      %185 = vector.extract_strided_slice %113 {offsets = [0, 4], sizes = [16, 1], strides = [1, 1]} : vector<16x8xf32> to vector<16x1xf32>
      %186 = vector.extract_strided_slice %110 {offsets = [4, 0], sizes = [1, 64], strides = [1, 1]} : vector<8x64xf32> to vector<1x64xf32>
      %187 = vector.broadcast %185 : vector<16x1xf32> to vector<16x64xf32>
      %188 = vector.broadcast %186 : vector<1x64xf32> to vector<16x64xf32>
      %189 = arith.mulf %187, %188 : vector<16x64xf32>
      %190 = arith.mulf %184, %175 : vector<16x64xf32>
      %191 = arith.addf %190, %189 : vector<16x64xf32>
      %192 = vector.extract_strided_slice %116 {offsets = [0, 4], sizes = [16, 1], strides = [1, 1]} : vector<16x8xf32> to vector<16x1xf32>
      %193 = vector.broadcast %192 : vector<16x1xf32> to vector<16x64xf32>
      %194 = arith.mulf %191, %193 : vector<16x64xf32>
      %cst_78 = arith.constant dense<0.000000e+00> : vector<64xf32>
      %195 = vector.multi_reduction <add>, %194, %cst_78 [0] : vector<16x64xf32> to vector<64xf32>
      %196 = vector.shape_cast %195 : vector<64xf32> to vector<1x64xf32>
      %197 = vector.extract_strided_slice %107 {offsets = [5, 0], sizes = [1, 64], strides = [1, 1]} : vector<8x64xf32> to vector<1x64xf32>
      %198 = vector.broadcast %197 : vector<1x64xf32> to vector<16x64xf32>
      %199 = arith.mulf %198, %77 : vector<16x64xf32>
      %200 = math.exp %199 : vector<16x64xf32>
      %201 = vector.extract_strided_slice %113 {offsets = [0, 5], sizes = [16, 1], strides = [1, 1]} : vector<16x8xf32> to vector<16x1xf32>
      %202 = vector.extract_strided_slice %110 {offsets = [5, 0], sizes = [1, 64], strides = [1, 1]} : vector<8x64xf32> to vector<1x64xf32>
      %203 = vector.broadcast %201 : vector<16x1xf32> to vector<16x64xf32>
      %204 = vector.broadcast %202 : vector<1x64xf32> to vector<16x64xf32>
      %205 = arith.mulf %203, %204 : vector<16x64xf32>
      %206 = arith.mulf %200, %191 : vector<16x64xf32>
      %207 = arith.addf %206, %205 : vector<16x64xf32>
      %208 = vector.extract_strided_slice %116 {offsets = [0, 5], sizes = [16, 1], strides = [1, 1]} : vector<16x8xf32> to vector<16x1xf32>
      %209 = vector.broadcast %208 : vector<16x1xf32> to vector<16x64xf32>
      %210 = arith.mulf %207, %209 : vector<16x64xf32>
      %cst_79 = arith.constant dense<0.000000e+00> : vector<64xf32>
      %211 = vector.multi_reduction <add>, %210, %cst_79 [0] : vector<16x64xf32> to vector<64xf32>
      %212 = vector.shape_cast %211 : vector<64xf32> to vector<1x64xf32>
      %213 = vector.extract_strided_slice %107 {offsets = [6, 0], sizes = [1, 64], strides = [1, 1]} : vector<8x64xf32> to vector<1x64xf32>
      %214 = vector.broadcast %213 : vector<1x64xf32> to vector<16x64xf32>
      %215 = arith.mulf %214, %77 : vector<16x64xf32>
      %216 = math.exp %215 : vector<16x64xf32>
      %217 = vector.extract_strided_slice %113 {offsets = [0, 6], sizes = [16, 1], strides = [1, 1]} : vector<16x8xf32> to vector<16x1xf32>
      %218 = vector.extract_strided_slice %110 {offsets = [6, 0], sizes = [1, 64], strides = [1, 1]} : vector<8x64xf32> to vector<1x64xf32>
      %219 = vector.broadcast %217 : vector<16x1xf32> to vector<16x64xf32>
      %220 = vector.broadcast %218 : vector<1x64xf32> to vector<16x64xf32>
      %221 = arith.mulf %219, %220 : vector<16x64xf32>
      %222 = arith.mulf %216, %207 : vector<16x64xf32>
      %223 = arith.addf %222, %221 : vector<16x64xf32>
      %224 = vector.extract_strided_slice %116 {offsets = [0, 6], sizes = [16, 1], strides = [1, 1]} : vector<16x8xf32> to vector<16x1xf32>
      %225 = vector.broadcast %224 : vector<16x1xf32> to vector<16x64xf32>
      %226 = arith.mulf %223, %225 : vector<16x64xf32>
      %cst_80 = arith.constant dense<0.000000e+00> : vector<64xf32>
      %227 = vector.multi_reduction <add>, %226, %cst_80 [0] : vector<16x64xf32> to vector<64xf32>
      %228 = vector.shape_cast %227 : vector<64xf32> to vector<1x64xf32>
      %229 = vector.extract_strided_slice %107 {offsets = [7, 0], sizes = [1, 64], strides = [1, 1]} : vector<8x64xf32> to vector<1x64xf32>
      %230 = vector.broadcast %229 : vector<1x64xf32> to vector<16x64xf32>
      %231 = arith.mulf %230, %77 : vector<16x64xf32>
      %232 = math.exp %231 : vector<16x64xf32>
      %233 = vector.extract_strided_slice %113 {offsets = [0, 7], sizes = [16, 1], strides = [1, 1]} : vector<16x8xf32> to vector<16x1xf32>
      %234 = vector.extract_strided_slice %110 {offsets = [7, 0], sizes = [1, 64], strides = [1, 1]} : vector<8x64xf32> to vector<1x64xf32>
      %235 = vector.broadcast %233 : vector<16x1xf32> to vector<16x64xf32>
      %236 = vector.broadcast %234 : vector<1x64xf32> to vector<16x64xf32>
      %237 = arith.mulf %235, %236 : vector<16x64xf32>
      %238 = arith.mulf %232, %223 : vector<16x64xf32>
      %239 = arith.addf %238, %237 : vector<16x64xf32>
      %240 = vector.extract_strided_slice %116 {offsets = [0, 7], sizes = [16, 1], strides = [1, 1]} : vector<16x8xf32> to vector<16x1xf32>
      %241 = vector.broadcast %240 : vector<16x1xf32> to vector<16x64xf32>
      %242 = arith.mulf %239, %241 : vector<16x64xf32>
      %cst_81 = arith.constant dense<0.000000e+00> : vector<64xf32>
      %243 = vector.multi_reduction <add>, %242, %cst_81 [0] : vector<16x64xf32> to vector<64xf32>
      %244 = vector.shape_cast %243 : vector<64xf32> to vector<1x64xf32>
      %245 = tpu.concatenate %132, %148, %164, %180, %196, %212, %228, %244 in 0 : vector<1x64xf32>, vector<1x64xf32>, vector<1x64xf32>, vector<1x64xf32>, vector<1x64xf32>, vector<1x64xf32>, vector<1x64xf32>, vector<1x64xf32> -> vector<8x64xf32>
      %246 = arith.index_cast %105 : i32 to index
      %c0_82 = arith.constant 0 : index
      %247 = vector.load %arg26[%246, %c0_82] : memref<16x64xf32, #tpu.memory_space<vmem>>, vector<8x64xf32>
      tpu.vector_store %arg26[%246, %c0_82], %245 {strides = array<i32>} : memref<16x64xf32, #tpu.memory_space<vmem>>, vector<8x64xf32>,
      scf.yield %239 : vector<16x64xf32>
    }
    %c2_i32_52 = arith.constant 2 : i32
    %c0_53 = arith.constant 0 : index
    %c0_54 = arith.constant 0 : index
    %81 = vector.load %arg20[%c0_53, %c0_54] : memref<16x64xf32, #tpu.memory_space<vmem>>, vector<16x64xf32>
    tpu.vector_store %arg20[%c0_53, %c0_54], %80 {strides = array<i32>} : memref<16x64xf32, #tpu.memory_space<vmem>>, vector<16x64xf32>,
    %c0_55 = arith.constant 0 : index
    %c0_56 = arith.constant 0 : index
    %82 = vector.load %arg26[%c0_55, %c0_56] : memref<16x64xf32, #tpu.memory_space<vmem>>, vector<16x64xf32>
    %c0_57 = arith.constant 0 : index
    %c0_58 = arith.constant 0 : index
    %83 = vector.load %arg16[%c0_57, %c0_58] : memref<1x64xf32, #tpu.memory_space<vmem>>, vector<1x64xf32>
    %84 = vector.broadcast %83 : vector<1x64xf32> to vector<16x64xf32>
    %85 = arith.mulf %84, %47 : vector<16x64xf32>
    %86 = arith.addf %82, %85 : vector<16x64xf32>
    %cst_59 = arith.constant 0.000000e+00 : f32
    %87 = vector.broadcast %cst_59 : f32 to vector<16x64xf32>
    %88 = arith.subf %87, %14 : vector<16x64xf32>
    %89 = math.exp %88 : vector<16x64xf32>
    %cst_60 = arith.constant 1.000000e+00 : f32
    %90 = vector.broadcast %cst_60 : f32 to vector<16x64xf32>
    %91 = arith.addf %90, %89 : vector<16x64xf32>
    %cst_61 = arith.constant 1.000000e+00 : f32
    %92 = vector.broadcast %cst_61 : f32 to vector<16x64xf32>
    %93 = arith.divf %92, %91 : vector<16x64xf32>
    %94 = arith.mulf %14, %93 : vector<16x64xf32>
    %95 = arith.mulf %86, %94 : vector<16x64xf32>
    %c0_62 = arith.constant 0 : index
    %c0_63 = arith.constant 0 : index
    %96 = vector.load %arg17[%c0_62, %c0_63] : memref<64x128xf32, #tpu.memory_space<vmem>>, vector<64x128xf32>
    %cst_64 = arith.constant dense<0.000000e+00> : vector<16x128xf32>
    %97 = tpu.matmul %95, %96, %cst_64 {dimension_numbers = #tpu.dot_dimension_numbers<[1], [0], [0], [1], [0, 0, 1, 1], [], []>} : vector<16x64xf32>, vector<64x128xf32>, vector<16x128xf32> -> vector<16x128xf32>
    %c0_65 = arith.constant 0 : index
    %c0_66 = arith.constant 0 : index
    %98 = vector.load %arg18[%c0_65, %c0_66] : memref<1x128xf32, #tpu.memory_space<vmem>>, vector<1x128xf32>
    %99 = vector.broadcast %98 : vector<1x128xf32> to vector<16x128xf32>
    %100 = arith.addf %97, %99 : vector<16x128xf32>
    %c0_67 = arith.constant 0 : index
    %c0_68 = arith.constant 0 : index
    %c0_69 = arith.constant 0 : index
    %101 = vector.load %arg19[%c0_67, %c0_68, %c0_69] : memref<1x16x128xf32, #tpu.memory_space<vmem>>, vector<1x16x128xf32>
    %102 = vector.shape_cast %101 : vector<1x16x128xf32> to vector<16x128xf32>
    %103 = vector.shape_cast %100 : vector<16x128xf32> to vector<1x16x128xf32>
    tpu.vector_store %arg19[%c0_67, %c0_68, %c0_69], %103 {strides = array<i32>} : memref<1x16x128xf32, #tpu.memory_space<vmem>>, vector<1x16x128xf32>,
    return
  }
  func.func @transform_0(%arg0: i32, %arg1: i32) -> (i32, i32, i32) {
    %c0_i32 = arith.constant 0 : i32
    %c0_i32_0 = arith.constant 0 : i32
    return %arg0, %arg1, %c0_i32 : i32, i32, i32
  }
  func.func @transform_1(%arg0: i32, %arg1: i32) -> (i32, i32) {
    %c0_i32 = arith.constant 0 : i32
    %c0_i32_0 = arith.constant 0 : i32
    %c0_i32_1 = arith.constant 0 : i32
    return %c0_i32, %c0_i32_0 : i32, i32
  }
  func.func @transform_2(%arg0: i32, %arg1: i32) -> (i32, i32) {
    %c0_i32 = arith.constant 0 : i32
    %c0_i32_0 = arith.constant 0 : i32
    %c0_i32_1 = arith.constant 0 : i32
    return %c0_i32, %c0_i32_0 : i32, i32
  }
  func.func @transform_3(%arg0: i32, %arg1: i32) -> (i32, i32) {
    %c0_i32 = arith.constant 0 : i32
    %c0_i32_0 = arith.constant 0 : i32
    %c0_i32_1 = arith.constant 0 : i32
    return %c0_i32, %c0_i32_0 : i32, i32
  }
  func.func @transform_4(%arg0: i32, %arg1: i32) -> (i32, i32) {
    %c0_i32 = arith.constant 0 : i32
    %c0_i32_0 = arith.constant 0 : i32
    %c0_i32_1 = arith.constant 0 : i32
    return %c0_i32, %c0_i32_0 : i32, i32
  }
  func.func @transform_5(%arg0: i32, %arg1: i32) -> (i32, i32) {
    %c0_i32 = arith.constant 0 : i32
    %c0_i32_0 = arith.constant 0 : i32
    %c0_i32_1 = arith.constant 0 : i32
    return %c0_i32, %c0_i32_0 : i32, i32
  }
  func.func @transform_6(%arg0: i32, %arg1: i32) -> (i32, i32) {
    %c0_i32 = arith.constant 0 : i32
    %c0_i32_0 = arith.constant 0 : i32
    %c0_i32_1 = arith.constant 0 : i32
    return %c0_i32, %c0_i32_0 : i32, i32
  }
  func.func @transform_7(%arg0: i32, %arg1: i32) -> (i32, i32) {
    %c0_i32 = arith.constant 0 : i32
    %c0_i32_0 = arith.constant 0 : i32
    %c0_i32_1 = arith.constant 0 : i32
    return %c0_i32, %c0_i32_0 : i32, i32
  }
  func.func @transform_8(%arg0: i32, %arg1: i32) -> (i32, i32) {
    %c0_i32 = arith.constant 0 : i32
    %c0_i32_0 = arith.constant 0 : i32
    %c0_i32_1 = arith.constant 0 : i32
    return %c0_i32, %c0_i32_0 : i32, i32
  }
  func.func @transform_9(%arg0: i32, %arg1: i32) -> (i32, i32) {
    %c0_i32 = arith.constant 0 : i32
    %c0_i32_0 = arith.constant 0 : i32
    %c0_i32_1 = arith.constant 0 : i32
    return %c0_i32, %c0_i32_0 : i32, i32
  }
  func.func @transform_10(%arg0: i32, %arg1: i32) -> (i32, i32) {
    %c0_i32 = arith.constant 0 : i32
    %c0_i32_0 = arith.constant 0 : i32
    %c0_i32_1 = arith.constant 0 : i32
    return %c0_i32, %c0_i32_0 : i32, i32
  }
  func.func @transform_11(%arg0: i32, %arg1: i32) -> (i32, i32) {
    %c0_i32 = arith.constant 0 : i32
    %c0_i32_0 = arith.constant 0 : i32
    %c0_i32_1 = arith.constant 0 : i32
    return %c0_i32, %c0_i32_0 : i32, i32
  }
  func.func @transform_12(%arg0: i32, %arg1: i32) -> (i32, i32) {
    %c0_i32 = arith.constant 0 : i32
    %c0_i32_0 = arith.constant 0 : i32
    %c0_i32_1 = arith.constant 0 : i32
    return %c0_i32, %c0_i32_0 : i32, i32
  }
  func.func @transform_13(%arg0: i32, %arg1: i32) -> (i32, i32) {
    %c0_i32 = arith.constant 0 : i32
    %c0_i32_0 = arith.constant 0 : i32
    %c0_i32_1 = arith.constant 0 : i32
    return %c0_i32, %c0_i32_0 : i32, i32
  }
  func.func @transform_14(%arg0: i32, %arg1: i32) -> (i32, i32) {
    %c0_i32 = arith.constant 0 : i32
    %c0_i32_0 = arith.constant 0 : i32
    %c0_i32_1 = arith.constant 0 : i32
    return %c0_i32, %c0_i32_0 : i32, i32
  }
  func.func @transform_15(%arg0: i32, %arg1: i32) -> (i32, i32) {
    %c0_i32 = arith.constant 0 : i32
    %c0_i32_0 = arith.constant 0 : i32
    %c0_i32_1 = arith.constant 0 : i32
    return %c0_i32, %c0_i32_0 : i32, i32
  }
  func.func @transform_16(%arg0: i32, %arg1: i32) -> (i32, i32) {
    %c0_i32 = arith.constant 0 : i32
    %c0_i32_0 = arith.constant 0 : i32
    %c0_i32_1 = arith.constant 0 : i32
    return %c0_i32, %c0_i32_0 : i32, i32
  }
  func.func @transform_17(%arg0: i32, %arg1: i32) -> (i32, i32, i32) {
    %c0_i32 = arith.constant 0 : i32
    %c0_i32_0 = arith.constant 0 : i32
    return %arg0, %arg1, %c0_i32 : i32, i32, i32
  }
}

</mosaic_0001>

<llo_original>
// kernel: tpu_custom_call.1
$region0: #{tpu_custom_call.1}
  #allocation0 [shape = 'u32[]', space=smem, size = 0x4, offset = 0x4, fixed_abs, tag = 'smem constant byte address 0x4 - core index']
  #allocation1 [shape = 'u32[144,128]{1,0:T(1,128)}', space=vmem, size = 0x12000, scoped, tag = 'internal scratch']
  #allocation2 [shape = 'f32[16,64]{1,0:T(8,128)}', space=vmem, size = 0x2000, scoped, tag = 'scratch operand']
  #allocation3 [shape = 'f32[8,64]{1,0:T(8,128)}', space=vmem, size = 0x1000, scoped, tag = 'scratch operand']
  #allocation4 [shape = 'f32[16,64]{1,0:T(8,128)}', space=vmem, size = 0x2000, scoped, tag = 'scratch operand']
  #allocation5 [shape = 'f32[16,64]{1,0:T(8,128)}', space=vmem, size = 0x2000, scoped, tag = 'scratch operand']
  #allocation6 [shape = 'f32[16,16]{1,0:T(8,128)}', space=vmem, size = 0x2000, scoped, tag = 'scratch operand']
  #allocation7 [shape = 'f32[16,16]{1,0:T(8,128)}', space=vmem, size = 0x2000, scoped, tag = 'scratch operand']
  #allocation8 [shape = 'f32[16,64]{1,0:T(8,128)}', space=vmem, size = 0x2000, scoped, tag = 'scratch operand']
  %s0 = inlined_call_operand.vmem [shape: f32[2,32,32], index: 0, kind: input, shape index: {}]
  %s1 = inlined_call_operand.hbm [shape: f32[32,64], index: 1, kind: input, shape index: {}]
  %s2 = inlined_call_operand.vmem [shape: f32[1,64], index: 2, kind: input, shape index: {}]
  %s3 = inlined_call_operand.hbm [shape: f32[32,64], index: 3, kind: input, shape index: {}]
  %s4 = inlined_call_operand.hbm [shape: f32[1,64], index: 4, kind: input, shape index: {}]
  %s5 = inlined_call_operand.hbm [shape: f32[4,64], index: 5, kind: input, shape index: {}]
  %s6 = inlined_call_operand.hbm [shape: f32[1,64], index: 6, kind: input, shape index: {}]
  %s7 = inlined_call_operand.vmem [shape: f32[64,64], index: 7, kind: input, shape index: {}]
  %s8 = inlined_call_operand.hbm [shape: f32[1,64], index: 8, kind: input, shape index: {}]
  %s9 = inlined_call_operand.vmem [shape: f32[64,16], index: 9, kind: input, shape index: {}]
  %s10 = inlined_call_operand.hbm [shape: f32[1,16], index: 10, kind: input, shape index: {}]
  %s11 = inlined_call_operand.vmem [shape: f32[64,16], index: 11, kind: input, shape index: {}]
  %s12 = inlined_call_operand.hbm [shape: f32[1,16], index: 12, kind: input, shape index: {}]
  %s13 = inlined_call_operand.vmem [shape: f32[16,64], index: 13, kind: input, shape index: {}]
  %s14 = inlined_call_operand.vmem [shape: f32[1,64], index: 14, kind: input, shape index: {}]
  %s15 = inlined_call_operand.vmem [shape: f32[64,128], index: 15, kind: input, shape index: {}]
  %s16 = inlined_call_operand.vmem [shape: f32[1,128], index: 16, kind: input, shape index: {}]
  %s17 = inlined_call_operand.hbm [shape: f32[2,32,128], index: 17, kind: output, shape index: {}]
  %s18 = sld [smem:[#allocation0]]
  $region144: #{tpu_custom_call.1} parent=0
    _
  %s20 = ssub.s32 1, %s18
  %s21 = scalar_select 0, %s20, %s18
  $region1: #{tpu_custom_call.1} parent=0
    #allocation9 [shape = 'u8[16384]{0}', space=vmem, size = 0x4000, scoped, tag = 'input window, operand 1, single buffered']
    #allocation10 [shape = 's32[2]{0}', space=sflag, size = 0x8, scoped, tag = 'scoped memory for tpu_custom_call.1']
    #allocation11 [shape = 's32[2]{0}', space=sflag, size = 0x8, scoped, tag = 'scoped memory for tpu_custom_call.1']
    #allocation12 [shape = 'u8[16384]{0}', space=vmem, size = 0x4000, scoped, tag = 'input window, operand 3, single buffered']
    #allocation13 [shape = 's32[1]{0}', space=sflag, size = 0x4, scoped, tag = 'scoped memory for tpu_custom_call.1']
    #allocation14 [shape = 'u8[512]{0}', space=vmem, size = 0x400, scoped, tag = 'input window, operand 4, single buffered']
    #allocation15 [shape = 'u8[2048]{0}', space=vmem, size = 0x800, scoped, tag = 'input window, operand 5, single buffered']
    #allocation16 [shape = 's32[1]{0}', space=sflag, size = 0x4, scoped, tag = 'scoped memory for tpu_custom_call.1']
    #allocation17 [shape = 'u8[512]{0}', space=vmem, size = 0x400, scoped, tag = 'input window, operand 6, single buffered']
    #allocation18 [shape = 'u8[512]{0}', space=vmem, size = 0x400, scoped, tag = 'input window, operand 8, single buffered']
    #allocation19 [shape = 's32[1]{0}', space=sflag, size = 0x4, scoped, tag = 'scoped memory for tpu_custom_call.1']
    #allocation20 [shape = 'u8[512]{0}', space=vmem, size = 0x400, scoped, tag = 'input window, operand 10, single buffered']
    #allocation21 [shape = 'u8[512]{0}', space=vmem, size = 0x400, scoped, tag = 'input window, operand 12, single buffered']
    #allocation22 [shape = 's32[1]{0}', space=sflag, size = 0x4, scoped, tag = 'scoped memory for tpu_custom_call.1']
    #allocation23 [shape = 'u8[16384]{0}', space=vmem, size = 0x4000, scoped, tag = 'output window, operand 0']
    %22 = vsyncpa [#allocation10], 0
    %23 = vsyncpa [#allocation13], 0
    %24 = vsyncpa [#allocation16], 0
    %25 = vsyncpa [#allocation19], 0
    %26 = vsyncpa [#allocation22], 0
    %27 = vsyncpa [#allocation11], 0
    %s28 = scalar_lea.sflag [#allocation11], 1
    %29 = vsyncpa %s28, 0
    loop: start=0, step=1, limit=6
    $region2: #{tpu_custom_call.1} parent=1 // loop_pre_header
      _
    $region3: #{tpu_custom_call.1} parent=1 // loop_header
      %s31 = sphi 0, %s35
      %p32 = scmp.ge.s32.totalorder %s31, 6
      %s38 = sphi 0, %s50
      %s39 = sphi 0, %s46
      %s40 = sphi 0, %s38
      %s41 = sphi 0, %s39
      %s42 = sphi 0, %s40
      %s43 = sphi 0, %s41
      %s55 = sphi 0, %s57
      %s58 = sphi 0, %s55
      %s59 = sphi 0, %s58
      %s75 = sphi 0, %s59
      %s79 = sphi 0, %s79
      %s81 = sphi 0, %s79
      %s82 = sphi 0, %s81
      %s96 = sphi 0, %s82
      %s100 = sphi 0, %s100
      %s102 = sphi 0, %s100
      %s103 = sphi 0, %s102
      %s117 = sphi 0, %s103
      %s121 = sphi 0, %s121
      %s123 = sphi 0, %s121
      %s124 = sphi 0, %s123
      %s138 = sphi 0, %s124
      %s142 = sphi 0, %s142
      %s144 = sphi 0, %s142
      %s145 = sphi 0, %s144
      %s159 = sphi 0, %s145
      %s163 = sphi 0, %s163
      %s165 = sphi 0, %s163
      %s166 = sphi 0, %s165
      %s180 = sphi 0, %s166
      %s184 = sphi 0, %s184
      %s186 = sphi 0, %s184
      %s187 = sphi 0, %s186
      %s201 = sphi 0, %s187
      %s205 = sphi 0, %s205
      %s207 = sphi 0, %s205
      %s208 = sphi 0, %s207
      %s222 = sphi 0, %s208
      %s226 = sphi 0, %s226
      %s228 = sphi 0, %s226
      %s229 = sphi 0, %s228
      %s243 = sphi 0, %s229
      %s247 = sphi 0, %s247
      %s249 = sphi 0, %s247
      %s250 = sphi 0, %s249
      %s264 = sphi 0, %s250
      %s268 = sphi 0, %s268
      %s270 = sphi 0, %s268
      %s271 = sphi 0, %s270
      %s285 = sphi 0, %s271
      %s289 = sphi 0, %s289
      %s291 = sphi 0, %s289
      %s292 = sphi 0, %s291
      %s306 = sphi 0, %s292
      %s310 = sphi 0, %s310
      %s312 = sphi 0, %s310
      %s313 = sphi 0, %s312
      %s327 = sphi 0, %s313
      %s331 = sphi 0, %s331
      %s333 = sphi 0, %s331
      %s334 = sphi 0, %s333
      %s348 = sphi 0, %s334
      %s352 = sphi 0, %s352
      %s354 = sphi 0, %s352
      %s355 = sphi 0, %s354
      %s369 = sphi 0, %s355
      %s373 = sphi 0, %s373
      %s375 = sphi 0, %s373
      %s376 = sphi 0, %s375
      %s390 = sphi 0, %s376
      %s394 = sphi 0, %s394
      %s396 = sphi 0, %s394
      %s397 = sphi 0, %s396
      %s411 = sphi 0, %s397
      %s419 = sphi 0, %s421
      %s422 = sphi 0, %s419
      %s423 = sphi 0, %s422
      %s439 = sphi 0, %s423
    $region4: #{tpu_custom_call.1} parent=1 // loop_header_branch
      %34 = sbr.rel (%p32) target = $region8
    $region5: #{tpu_custom_call.1} parent=1 // loop_body
      %s36 = ssub.s32 %s31, 1
      %s37 = ssub.s32 %s31, 2
      %s44 = sadd.s32 1, %s39
      %p45 = scmp.ge.s32.totalorder %s44, 2
      %s46 = scalar_select %p45, 0, %s44
      %s47 = sadd.s32 1, %s38
      %s48 = scalar_select %p45, %s47, %s38
      %p49 = scmp.ge.s32.totalorder %s48, 2
      %s50 = scalar_select %p49, 0, %s48
      %s51 = ssub.s32 %s38, %s50
      %s52 = ssub.s32 %s39, %s46
      %s53 = sor.u32 %s51, %s52
      %p54 = scmp.eq.s32.totalorder %s53, 0
      %s56 = sadd.s32 %s55, 1
      %s57 = scalar_select %p54, %s55, %s56
      %p60 = pneg %p54
      %p61 = scmp.eq.s32.totalorder %s31, 3
      %p62 = por %p60, %p61
      %p63 = scmp.ne.s32.totalorder %s55, %s58
      %p64 = scmp.eq.s32.totalorder %s31, 0
      %p65 = por %p63, %p64
      %p66 = scmp.ne.s32.totalorder %s55, %s58
      %p67 = scmp.eq.s32.totalorder %s36, 3
      %p68 = por %p66, %p67
      %p69 = scmp.ne.s32.totalorder %s58, %s59
      %p70 = scmp.eq.s32.totalorder %s36, 0
      %p71 = por %p69, %p70
      %p72 = scmp.ne.s32.totalorder %s58, %s59
      %p73 = scmp.eq.s32.totalorder %s37, 3
      %p74 = por %p72, %p73
      %p76 = scmp.ne.s32.totalorder %s59, %s75
      %p77 = scmp.eq.s32.totalorder %s37, 0
      %p78 = por %p76, %p77
      %s80 = sadd.s32 %s79, 1
      %p83 = scmp.eq.s32.totalorder %s31, 3
      %p84 = scmp.ne.s32.totalorder %s79, %s81
      %p85 = scmp.eq.s32.totalorder %s31, 0
      %p86 = por %p84, %p85
      %p87 = scmp.ne.s32.totalorder %s79, %s81
      %p88 = scmp.eq.s32.totalorder %s36, 3
      %p89 = por %p87, %p88
      %p90 = scmp.ne.s32.totalorder %s81, %s82
      %p91 = scmp.eq.s32.totalorder %s36, 0
      %p92 = por %p90, %p91
      %p93 = scmp.ne.s32.totalorder %s81, %s82
      %p94 = scmp.eq.s32.totalorder %s37, 3
      %p95 = por %p93, %p94
      %p97 = scmp.ne.s32.totalorder %s82, %s96
      %p98 = scmp.eq.s32.totalorder %s37, 0
      %p99 = por %p97, %p98
      %s101 = sadd.s32 %s100, 1
      %p104 = scmp.eq.s32.totalorder %s31, 3
      %p105 = scmp.ne.s32.totalorder %s100, %s102
      %p106 = scmp.eq.s32.totalorder %s31, 0
      %p107 = por %p105, %p106
      %p108 = scmp.ne.s32.totalorder %s100, %s102
      %p109 = scmp.eq.s32.totalorder %s36, 3
      %p110 = por %p108, %p109
      %p111 = scmp.ne.s32.totalorder %s102, %s103
      %p112 = scmp.eq.s32.totalorder %s36, 0
      %p113 = por %p111, %p112
      %p114 = scmp.ne.s32.totalorder %s102, %s103
      %p115 = scmp.eq.s32.totalorder %s37, 3
      %p116 = por %p114, %p115
      %p118 = scmp.ne.s32.totalorder %s103, %s117
      %p119 = scmp.eq.s32.totalorder %s37, 0
      %p120 = por %p118, %p119
      %s122 = sadd.s32 %s121, 1
      %p125 = scmp.eq.s32.totalorder %s31, 3
      %p126 = scmp.ne.s32.totalorder %s121, %s123
      %p127 = scmp.eq.s32.totalorder %s31, 0
      %p128 = por %p126, %p127
      %p129 = scmp.ne.s32.totalorder %s121, %s123
      %p130 = scmp.eq.s32.totalorder %s36, 3
      %p131 = por %p129, %p130
      %p132 = scmp.ne.s32.totalorder %s123, %s124
      %p133 = scmp.eq.s32.totalorder %s36, 0
      %p134 = por %p132, %p133
      %p135 = scmp.ne.s32.totalorder %s123, %s124
      %p136 = scmp.eq.s32.totalorder %s37, 3
      %p137 = por %p135, %p136
      %p139 = scmp.ne.s32.totalorder %s124, %s138
      %p140 = scmp.eq.s32.totalorder %s37, 0
      %p141 = por %p139, %p140
      %s143 = sadd.s32 %s142, 1
      %p146 = scmp.eq.s32.totalorder %s31, 3
      %p147 = scmp.ne.s32.totalorder %s142, %s144
      %p148 = scmp.eq.s32.totalorder %s31, 0
      %p149 = por %p147, %p148
      %p150 = scmp.ne.s32.totalorder %s142, %s144
      %p151 = scmp.eq.s32.totalorder %s36, 3
      %p152 = por %p150, %p151
      %p153 = scmp.ne.s32.totalorder %s144, %s145
      %p154 = scmp.eq.s32.totalorder %s36, 0
      %p155 = por %p153, %p154
      %p156 = scmp.ne.s32.totalorder %s144, %s145
      %p157 = scmp.eq.s32.totalorder %s37, 3
      %p158 = por %p156, %p157
      %p160 = scmp.ne.s32.totalorder %s145, %s159
      %p161 = scmp.eq.s32.totalorder %s37, 0
      %p162 = por %p160, %p161
      %s164 = sadd.s32 %s163, 1
      %p167 = scmp.eq.s32.totalorder %s31, 3
      %p168 = scmp.ne.s32.totalorder %s163, %s165
      %p169 = scmp.eq.s32.totalorder %s31, 0
      %p170 = por %p168, %p169
      %p171 = scmp.ne.s32.totalorder %s163, %s165
      %p172 = scmp.eq.s32.totalorder %s36, 3
      %p173 = por %p171, %p172
      %p174 = scmp.ne.s32.totalorder %s165, %s166
      %p175 = scmp.eq.s32.totalorder %s36, 0
      %p176 = por %p174, %p175
      %p177 = scmp.ne.s32.totalorder %s165, %s166
      %p178 = scmp.eq.s32.totalorder %s37, 3
      %p179 = por %p177, %p178
      %p181 = scmp.ne.s32.totalorder %s166, %s180
      %p182 = scmp.eq.s32.totalorder %s37, 0
      %p183 = por %p181, %p182
      %s185 = sadd.s32 %s184, 1
      %p188 = scmp.eq.s32.totalorder %s31, 3
      %p189 = scmp.ne.s32.totalorder %s184, %s186
      %p190 = scmp.eq.s32.totalorder %s31, 0
      %p191 = por %p189, %p190
      %p192 = scmp.ne.s32.totalorder %s184, %s186
      %p193 = scmp.eq.s32.totalorder %s36, 3
      %p194 = por %p192, %p193
      %p195 = scmp.ne.s32.totalorder %s186, %s187
      %p196 = scmp.eq.s32.totalorder %s36, 0
      %p197 = por %p195, %p196
      %p198 = scmp.ne.s32.totalorder %s186, %s187
      %p199 = scmp.eq.s32.totalorder %s37, 3
      %p200 = por %p198, %p199
      %p202 = scmp.ne.s32.totalorder %s187, %s201
      %p203 = scmp.eq.s32.totalorder %s37, 0
      %p204 = por %p202, %p203
      %s206 = sadd.s32 %s205, 1
      %p209 = scmp.eq.s32.totalorder %s31, 3
      %p210 = scmp.ne.s32.totalorder %s205, %s207
      %p211 = scmp.eq.s32.totalorder %s31, 0
      %p212 = por %p210, %p211
      %p213 = scmp.ne.s32.totalorder %s205, %s207
      %p214 = scmp.eq.s32.totalorder %s36, 3
      %p215 = por %p213, %p214
      %p216 = scmp.ne.s32.totalorder %s207, %s208
      %p217 = scmp.eq.s32.totalorder %s36, 0
      %p218 = por %p216, %p217
      %p219 = scmp.ne.s32.totalorder %s207, %s208
      %p220 = scmp.eq.s32.totalorder %s37, 3
      %p221 = por %p219, %p220
      %p223 = scmp.ne.s32.totalorder %s208, %s222
      %p224 = scmp.eq.s32.totalorder %s37, 0
      %p225 = por %p223, %p224
      %s227 = sadd.s32 %s226, 1
      %p230 = scmp.eq.s32.totalorder %s31, 3
      %p231 = scmp.ne.s32.totalorder %s226, %s228
      %p232 = scmp.eq.s32.totalorder %s31, 0
      %p233 = por %p231, %p232
      %p234 = scmp.ne.s32.totalorder %s226, %s228
      %p235 = scmp.eq.s32.totalorder %s36, 3
      %p236 = por %p234, %p235
      %p237 = scmp.ne.s32.totalorder %s228, %s229
      %p238 = scmp.eq.s32.totalorder %s36, 0
      %p239 = por %p237, %p238
      %p240 = scmp.ne.s32.totalorder %s228, %s229
      %p241 = scmp.eq.s32.totalorder %s37, 3
      %p242 = por %p240, %p241
      %p244 = scmp.ne.s32.totalorder %s229, %s243
      %p245 = scmp.eq.s32.totalorder %s37, 0
      %p246 = por %p244, %p245
      %s248 = sadd.s32 %s247, 1
      %p251 = scmp.eq.s32.totalorder %s31, 3
      %p252 = scmp.ne.s32.totalorder %s247, %s249
      %p253 = scmp.eq.s32.totalorder %s31, 0
      %p254 = por %p252, %p253
      %p255 = scmp.ne.s32.totalorder %s247, %s249
      %p256 = scmp.eq.s32.totalorder %s36, 3
      %p257 = por %p255, %p256
      %p258 = scmp.ne.s32.totalorder %s249, %s250
      %p259 = scmp.eq.s32.totalorder %s36, 0
      %p260 = por %p258, %p259
      %p261 = scmp.ne.s32.totalorder %s249, %s250
      %p262 = scmp.eq.s32.totalorder %s37, 3
      %p263 = por %p261, %p262
      %p265 = scmp.ne.s32.totalorder %s250, %s264
      %p266 = scmp.eq.s32.totalorder %s37, 0
      %p267 = por %p265, %p266
      %s269 = sadd.s32 %s268, 1
      %p272 = scmp.eq.s32.totalorder %s31, 3
      %p273 = scmp.ne.s32.totalorder %s268, %s270
      %p274 = scmp.eq.s32.totalorder %s31, 0
      %p275 = por %p273, %p274
      %p276 = scmp.ne.s32.totalorder %s268, %s270
      %p277 = scmp.eq.s32.totalorder %s36, 3
      %p278 = por %p276, %p277
      %p279 = scmp.ne.s32.totalorder %s270, %s271
      %p280 = scmp.eq.s32.totalorder %s36, 0
      %p281 = por %p279, %p280
      %p282 = scmp.ne.s32.totalorder %s270, %s271
      %p283 = scmp.eq.s32.totalorder %s37, 3
      %p284 = por %p282, %p283
      %p286 = scmp.ne.s32.totalorder %s271, %s285
      %p287 = scmp.eq.s32.totalorder %s37, 0
      %p288 = por %p286, %p287
      %s290 = sadd.s32 %s289, 1
      %p293 = scmp.eq.s32.totalorder %s31, 3
      %p294 = scmp.ne.s32.totalorder %s289, %s291
      %p295 = scmp.eq.s32.totalorder %s31, 0
      %p296 = por %p294, %p295
      %p297 = scmp.ne.s32.totalorder %s289, %s291
      %p298 = scmp.eq.s32.totalorder %s36, 3
      %p299 = por %p297, %p298
      %p300 = scmp.ne.s32.totalorder %s291, %s292
      %p301 = scmp.eq.s32.totalorder %s36, 0
      %p302 = por %p300, %p301
      %p303 = scmp.ne.s32.totalorder %s291, %s292
      %p304 = scmp.eq.s32.totalorder %s37, 3
      %p305 = por %p303, %p304
      %p307 = scmp.ne.s32.totalorder %s292, %s306
      %p308 = scmp.eq.s32.totalorder %s37, 0
      %p309 = por %p307, %p308
      %s311 = sadd.s32 %s310, 1
      %p314 = scmp.eq.s32.totalorder %s31, 3
      %p315 = scmp.ne.s32.totalorder %s310, %s312
      %p316 = scmp.eq.s32.totalorder %s31, 0
      %p317 = por %p315, %p316
      %p318 = scmp.ne.s32.totalorder %s310, %s312
      %p319 = scmp.eq.s32.totalorder %s36, 3
      %p320 = por %p318, %p319
      %p321 = scmp.ne.s32.totalorder %s312, %s313
      %p322 = scmp.eq.s32.totalorder %s36, 0
      %p323 = por %p321, %p322
      %p324 = scmp.ne.s32.totalorder %s312, %s313
      %p325 = scmp.eq.s32.totalorder %s37, 3
      %p326 = por %p324, %p325
      %p328 = scmp.ne.s32.totalorder %s313, %s327
      %p329 = scmp.eq.s32.totalorder %s37, 0
      %p330 = por %p328, %p329
      %s332 = sadd.s32 %s331, 1
      %p335 = scmp.eq.s32.totalorder %s31, 3
      %p336 = scmp.ne.s32.totalorder %s331, %s333
      %p337 = scmp.eq.s32.totalorder %s31, 0
      %p338 = por %p336, %p337
      %p339 = scmp.ne.s32.totalorder %s331, %s333
      %p340 = scmp.eq.s32.totalorder %s36, 3
      %p341 = por %p339, %p340
      %p342 = scmp.ne.s32.totalorder %s333, %s334
      %p343 = scmp.eq.s32.totalorder %s36, 0
      %p344 = por %p342, %p343
      %p345 = scmp.ne.s32.totalorder %s333, %s334
      %p346 = scmp.eq.s32.totalorder %s37, 3
      %p347 = por %p345, %p346
      %p349 = scmp.ne.s32.totalorder %s334, %s348
      %p350 = scmp.eq.s32.totalorder %s37, 0
      %p351 = por %p349, %p350
      %s353 = sadd.s32 %s352, 1
      %p356 = scmp.eq.s32.totalorder %s31, 3
      %p357 = scmp.ne.s32.totalorder %s352, %s354
      %p358 = scmp.eq.s32.totalorder %s31, 0
      %p359 = por %p357, %p358
      %p360 = scmp.ne.s32.totalorder %s352, %s354
      %p361 = scmp.eq.s32.totalorder %s36, 3
      %p362 = por %p360, %p361
      %p363 = scmp.ne.s32.totalorder %s354, %s355
      %p364 = scmp.eq.s32.totalorder %s36, 0
      %p365 = por %p363, %p364
      %p366 = scmp.ne.s32.totalorder %s354, %s355
      %p367 = scmp.eq.s32.totalorder %s37, 3
      %p368 = por %p366, %p367
      %p370 = scmp.ne.s32.totalorder %s355, %s369
      %p371 = scmp.eq.s32.totalorder %s37, 0
      %p372 = por %p370, %p371
      %s374 = sadd.s32 %s373, 1
      %p377 = scmp.eq.s32.totalorder %s31, 3
      %p378 = scmp.ne.s32.totalorder %s373, %s375
      %p379 = scmp.eq.s32.totalorder %s31, 0
      %p380 = por %p378, %p379
      %p381 = scmp.ne.s32.totalorder %s373, %s375
      %p382 = scmp.eq.s32.totalorder %s36, 3
      %p383 = por %p381, %p382
      %p384 = scmp.ne.s32.totalorder %s375, %s376
      %p385 = scmp.eq.s32.totalorder %s36, 0
      %p386 = por %p384, %p385
      %p387 = scmp.ne.s32.totalorder %s375, %s376
      %p388 = scmp.eq.s32.totalorder %s37, 3
      %p389 = por %p387, %p388
      %p391 = scmp.ne.s32.totalorder %s376, %s390
      %p392 = scmp.eq.s32.totalorder %s37, 0
      %p393 = por %p391, %p392
      %s395 = sadd.s32 %s394, 1
      %p398 = scmp.eq.s32.totalorder %s31, 3
      %p399 = scmp.ne.s32.totalorder %s394, %s396
      %p400 = scmp.eq.s32.totalorder %s31, 0
      %p401 = por %p399, %p400
      %p402 = scmp.ne.s32.totalorder %s394, %s396
      %p403 = scmp.eq.s32.totalorder %s36, 3
      %p404 = por %p402, %p403
      %p405 = scmp.ne.s32.totalorder %s396, %s397
      %p406 = scmp.eq.s32.totalorder %s36, 0
      %p407 = por %p405, %p406
      %p408 = scmp.ne.s32.totalorder %s396, %s397
      %p409 = scmp.eq.s32.totalorder %s37, 3
      %p410 = por %p408, %p409
      %p412 = scmp.ne.s32.totalorder %s397, %s411
      %p413 = scmp.eq.s32.totalorder %s37, 0
      %p414 = por %p412, %p413
      %s415 = ssub.s32 %s38, %s50
      %s416 = ssub.s32 %s39, %s46
      %s417 = sor.u32 %s415, %s416
      %p418 = scmp.eq.s32.totalorder %s417, 0
      %s420 = sadd.s32 %s419, 1
      %s421 = scalar_select %p418, %s419, %s420
      %p424 = pneg %p418
      %p425 = scmp.eq.s32.totalorder %s31, 3
      %p426 = por %p424, %p425
      %p427 = scmp.ne.s32.totalorder %s419, %s422
      %p428 = scmp.eq.s32.totalorder %s31, 0
      %p429 = por %p427, %p428
      %p430 = scmp.ne.s32.totalorder %s419, %s422
      %p431 = scmp.eq.s32.totalorder %s36, 3
      %p432 = por %p430, %p431
      %p433 = scmp.ne.s32.totalorder %s422, %s423
      %p434 = scmp.eq.s32.totalorder %s36, 0
      %p435 = por %p433, %p434
      %p436 = scmp.ne.s32.totalorder %s422, %s423
      %p437 = scmp.eq.s32.totalorder %s37, 3
      %p438 = por %p436, %p437
      %p440 = scmp.ne.s32.totalorder %s423, %s439
      %p441 = scmp.eq.s32.totalorder %s37, 0
      %p442 = por %p440, %p441
      %p443 = scmp.le.s32.totalorder 1, %s31
      %p444 = scmp.lt.s32.totalorder %s31, 5
      %p445 = pnand %p443, %p444
      %p446 = pneg %p445
      // Predicated region
      $region9: #{tpu_custom_call.1} parent=5 // pred_check
        _
      $region10: #{tpu_custom_call.1} parent=5 // pred_check_branch
        %448 = sbr.rel (%p445) target = $region12
      $region11: #{tpu_custom_call.1} parent=5 // pred_region
        %s449 = ssub.s32 %s31, 1
        // Predicated region
        $region13: #{tpu_custom_call.1} parent=11 // pred_check
          %p450 = pneg %p92
        $region14: #{tpu_custom_call.1} parent=11 // pred_check_branch
          %452 = sbr.rel (%p450) target = $region16
        $region15: #{tpu_custom_call.1} parent=11 // pred_region
          %s454 = ssub.s32 512, 512
          %455 = vsyncadd [#allocation10], %s454
          %s456 = sshll.u32 [#allocation9], 4
          %s457 = int_to_ptr.vmem [resolvable:$true] %s456
          %462 = dma.hbm_to_vmem [thread:$0]  %s1, 512, %s457, [#allocation10], 128, 128, 8
        $region16: #{tpu_custom_call.1} parent=11 // pred_fallthru
          _
        // Predicated region
        $region17: #{tpu_custom_call.1} parent=11 // pred_check
          %p463 = pneg %p113
        $region18: #{tpu_custom_call.1} parent=11 // pred_check_branch
          %465 = sbr.rel (%p463) target = $region20
        $region19: #{tpu_custom_call.1} parent=11 // pred_region
          _
        $region20: #{tpu_custom_call.1} parent=11 // pred_fallthru
          _
        // Predicated region
        $region21: #{tpu_custom_call.1} parent=11 // pred_check
          %p466 = pneg %p134
        $region22: #{tpu_custom_call.1} parent=11 // pred_check_branch
          %468 = sbr.rel (%p466) target = $region24
        $region23: #{tpu_custom_call.1} parent=11 // pred_region
          %s470 = ssub.s32 512, 512
          %471 = vsyncadd [#allocation13], %s470
          %s472 = sshll.u32 [#allocation12], 4
          %s473 = int_to_ptr.vmem [resolvable:$true] %s472
          %478 = dma.hbm_to_vmem [thread:$0]  %s3, 512, %s473, [#allocation13], 128, 128, 8
        $region24: #{tpu_custom_call.1} parent=11 // pred_fallthru
          _
        // Predicated region
        $region25: #{tpu_custom_call.1} parent=11 // pred_check
          %p479 = pneg %p155
        $region26: #{tpu_custom_call.1} parent=11 // pred_check_branch
          %481 = sbr.rel (%p479) target = $region28
        $region27: #{tpu_custom_call.1} parent=11 // pred_region
          %s483 = ssub.s32 16, 16
          %484 = vsyncadd [#allocation13], %s483
          %s486 = sshll.u32 [#allocation14], 4
          %s487 = int_to_ptr.vmem [resolvable:$true] %s486
          %489 = dma.hbm_to_vmem [thread:$0]  %s4, 16, %s487, [#allocation13]
        $region28: #{tpu_custom_call.1} parent=11 // pred_fallthru
          _
        // Predicated region
        $region29: #{tpu_custom_call.1} parent=11 // pred_check
          %p490 = pneg %p176
        $region30: #{tpu_custom_call.1} parent=11 // pred_check_branch
          %492 = sbr.rel (%p490) target = $region32
        $region31: #{tpu_custom_call.1} parent=11 // pred_region
          %s494 = ssub.s32 64, 64
          %495 = vsyncadd [#allocation16], %s494
          %s497 = sshll.u32 [#allocation15], 4
          %s498 = int_to_ptr.vmem [resolvable:$true] %s497
          %500 = dma.hbm_to_vmem [thread:$0]  %s5, 64, %s498, [#allocation16]
        $region32: #{tpu_custom_call.1} parent=11 // pred_fallthru
          _
        // Predicated region
        $region33: #{tpu_custom_call.1} parent=11 // pred_check
          %p501 = pneg %p197
        $region34: #{tpu_custom_call.1} parent=11 // pred_check_branch
          %503 = sbr.rel (%p501) target = $region36
        $region35: #{tpu_custom_call.1} parent=11 // pred_region
          %s505 = ssub.s32 16, 16
          %506 = vsyncadd [#allocation16], %s505
          %s508 = sshll.u32 [#allocation17], 4
          %s509 = int_to_ptr.vmem [resolvable:$true] %s508
          %511 = dma.hbm_to_vmem [thread:$0]  %s6, 16, %s509, [#allocation16]
        $region36: #{tpu_custom_call.1} parent=11 // pred_fallthru
          _
        // Predicated region
        $region37: #{tpu_custom_call.1} parent=11 // pred_check
          %p512 = pneg %p218
        $region38: #{tpu_custom_call.1} parent=11 // pred_check_branch
          %514 = sbr.rel (%p512) target = $region40
        $region39: #{tpu_custom_call.1} parent=11 // pred_region
          _
        $region40: #{tpu_custom_call.1} parent=11 // pred_fallthru
          _
        // Predicated region
        $region41: #{tpu_custom_call.1} parent=11 // pred_check
          %p515 = pneg %p239
        $region42: #{tpu_custom_call.1} parent=11 // pred_check_branch
          %517 = sbr.rel (%p515) target = $region44
        $region43: #{tpu_custom_call.1} parent=11 // pred_region
          %s519 = ssub.s32 16, 16
          %520 = vsyncadd [#allocation19], %s519
          %s522 = sshll.u32 [#allocation18], 4
          %s523 = int_to_ptr.vmem [resolvable:$true] %s522
          %525 = dma.hbm_to_vmem [thread:$0]  %s8, 16, %s523, [#allocation19]
        $region44: #{tpu_custom_call.1} parent=11 // pred_fallthru
          _
        // Predicated region
        $region45: #{tpu_custom_call.1} parent=11 // pred_check
          %p526 = pneg %p260
        $region46: #{tpu_custom_call.1} parent=11 // pred_check_branch
          %528 = sbr.rel (%p526) target = $region48
        $region47: #{tpu_custom_call.1} parent=11 // pred_region
          _
        $region48: #{tpu_custom_call.1} parent=11 // pred_fallthru
          _
        // Predicated region
        $region49: #{tpu_custom_call.1} parent=11 // pred_check
          %p529 = pneg %p281
        $region50: #{tpu_custom_call.1} parent=11 // pred_check_branch
          %531 = sbr.rel (%p529) target = $region52
        $region51: #{tpu_custom_call.1} parent=11 // pred_region
          %s533 = ssub.s32 16, 16
          %534 = vsyncadd [#allocation19], %s533
          %s536 = sshll.u32 [#allocation20], 4
          %s537 = int_to_ptr.vmem [resolvable:$true] %s536
          %539 = dma.hbm_to_vmem [thread:$0]  %s10, 16, %s537, [#allocation19]
        $region52: #{tpu_custom_call.1} parent=11 // pred_fallthru
          _
        // Predicated region
        $region53: #{tpu_custom_call.1} parent=11 // pred_check
          %p540 = pneg %p302
        $region54: #{tpu_custom_call.1} parent=11 // pred_check_branch
          %542 = sbr.rel (%p540) target = $region56
        $region55: #{tpu_custom_call.1} parent=11 // pred_region
          _
        $region56: #{tpu_custom_call.1} parent=11 // pred_fallthru
          _
        // Predicated region
        $region57: #{tpu_custom_call.1} parent=11 // pred_check
          %p543 = pneg %p323
        $region58: #{tpu_custom_call.1} parent=11 // pred_check_branch
          %545 = sbr.rel (%p543) target = $region60
        $region59: #{tpu_custom_call.1} parent=11 // pred_region
          %s547 = ssub.s32 16, 16
          %548 = vsyncadd [#allocation22], %s547
          %s550 = sshll.u32 [#allocation21], 4
          %s551 = int_to_ptr.vmem [resolvable:$true] %s550
          %553 = dma.hbm_to_vmem [thread:$0]  %s12, 16, %s551, [#allocation22]
        $region60: #{tpu_custom_call.1} parent=11 // pred_fallthru
          _
        // Predicated region
        $region61: #{tpu_custom_call.1} parent=11 // pred_check
          %p554 = pneg %p344
        $region62: #{tpu_custom_call.1} parent=11 // pred_check_branch
          %556 = sbr.rel (%p554) target = $region64
        $region63: #{tpu_custom_call.1} parent=11 // pred_region
          _
        $region64: #{tpu_custom_call.1} parent=11 // pred_fallthru
          _
        // Predicated region
        $region65: #{tpu_custom_call.1} parent=11 // pred_check
          %p557 = pneg %p365
        $region66: #{tpu_custom_call.1} parent=11 // pred_check_branch
          %559 = sbr.rel (%p557) target = $region68
        $region67: #{tpu_custom_call.1} parent=11 // pred_region
          _
        $region68: #{tpu_custom_call.1} parent=11 // pred_fallthru
          _
        // Predicated region
        $region69: #{tpu_custom_call.1} parent=11 // pred_check
          %p560 = pneg %p386
        $region70: #{tpu_custom_call.1} parent=11 // pred_check_branch
          %562 = sbr.rel (%p560) target = $region72
        $region71: #{tpu_custom_call.1} parent=11 // pred_region
          _
        $region72: #{tpu_custom_call.1} parent=11 // pred_fallthru
          _
        // Predicated region
        $region73: #{tpu_custom_call.1} parent=11 // pred_check
          %p563 = pneg %p407
        $region74: #{tpu_custom_call.1} parent=11 // pred_check_branch
          %565 = sbr.rel (%p563) target = $region76
        $region75: #{tpu_custom_call.1} parent=11 // pred_region
          _
        $region76: #{tpu_custom_call.1} parent=11 // pred_fallthru
          _
      $region12: #{tpu_custom_call.1} parent=5 // pred_fallthru
        _
      %p566 = scmp.lt.s32.totalorder %s31, 4
      // Predicated region
      $region77: #{tpu_custom_call.1} parent=5 // pred_check
        %p567 = pneg %p566
      $region78: #{tpu_custom_call.1} parent=5 // pred_check_branch
        %569 = sbr.rel (%p567) target = $region80
      $region79: #{tpu_custom_call.1} parent=5 // pred_region
        // Predicated region
        $region81: #{tpu_custom_call.1} parent=79 // pred_check
          %p570 = pneg %p65
        $region82: #{tpu_custom_call.1} parent=79 // pred_check_branch
          %572 = sbr.rel (%p570) target = $region84
        $region83: #{tpu_custom_call.1} parent=79 // pred_region
          %s573 = smul.u32 2, %s39
          %p574 = scmp.lt.s32.totalorder %s38, 1
          %s575 = scalar_select %p574, %s38, 1
          %p576 = scmp.lt.s32.totalorder %s573, 3
          %s577 = scalar_select %p576, %s573, 3
          %s578 = smul.addr %s575, 4
          %s579 = sadd.s32 %s577, %s578
          %s580 = smul.addr %s579, 8
          %s581 = scalar_lea.vmem %s0, %s580
          %s582 = smul.u32 2, %s39
        $region84: #{tpu_custom_call.1} parent=79 // pred_fallthru
          _
      $region80: #{tpu_custom_call.1} parent=5 // pred_fallthru
        _
      %p583 = scmp.le.s32.totalorder 1, %s31
      %p584 = scmp.lt.s32.totalorder %s31, 5
      %p585 = pnand %p583, %p584
      %p586 = pneg %p585
      // Predicated region
      $region85: #{tpu_custom_call.1} parent=5 // pred_check
        _
      $region86: #{tpu_custom_call.1} parent=5 // pred_check_branch
        %588 = sbr.rel (%p585) target = $region88
      $region87: #{tpu_custom_call.1} parent=5 // pred_region
        %s589 = ssub.s32 %s31, 1
        // Predicated region
        $region89: #{tpu_custom_call.1} parent=87 // pred_check
          %p590 = pneg %p92
        $region90: #{tpu_custom_call.1} parent=87 // pred_check_branch
          %592 = sbr.rel (%p590) target = $region92
        $region91: #{tpu_custom_call.1} parent=87 // pred_region
          %593 = dma.done [#allocation10], 512
        $region92: #{tpu_custom_call.1} parent=87 // pred_fallthru
          _
        // Predicated region
        $region93: #{tpu_custom_call.1} parent=87 // pred_check
          %p594 = pneg %p134
        $region94: #{tpu_custom_call.1} parent=87 // pred_check_branch
          %596 = sbr.rel (%p594) target = $region96
        $region95: #{tpu_custom_call.1} parent=87 // pred_region
          %597 = dma.done [#allocation13], 512
        $region96: #{tpu_custom_call.1} parent=87 // pred_fallthru
          _
        // Predicated region
        $region97: #{tpu_custom_call.1} parent=87 // pred_check
          %p598 = pneg %p155
        $region98: #{tpu_custom_call.1} parent=87 // pred_check_branch
          %600 = sbr.rel (%p598) target = $region100
        $region99: #{tpu_custom_call.1} parent=87 // pred_region
          %601 = dma.done [#allocation13], 16
        $region100: #{tpu_custom_call.1} parent=87 // pred_fallthru
          _
        // Predicated region
        $region101: #{tpu_custom_call.1} parent=87 // pred_check
          %p602 = pneg %p176
        $region102: #{tpu_custom_call.1} parent=87 // pred_check_branch
          %604 = sbr.rel (%p602) target = $region104
        $region103: #{tpu_custom_call.1} parent=87 // pred_region
          %605 = dma.done [#allocation16], 64
        $region104: #{tpu_custom_call.1} parent=87 // pred_fallthru
          _
        // Predicated region
        $region105: #{tpu_custom_call.1} parent=87 // pred_check
          %p606 = pneg %p197
        $region106: #{tpu_custom_call.1} parent=87 // pred_check_branch
          %608 = sbr.rel (%p606) target = $region108
        $region107: #{tpu_custom_call.1} parent=87 // pred_region
          %609 = dma.done [#allocation16], 16
        $region108: #{tpu_custom_call.1} parent=87 // pred_fallthru
          _
        // Predicated region
        $region109: #{tpu_custom_call.1} parent=87 // pred_check
          %p610 = pneg %p239
        $region110: #{tpu_custom_call.1} parent=87 // pred_check_branch
          %612 = sbr.rel (%p610) target = $region112
        $region111: #{tpu_custom_call.1} parent=87 // pred_region
          %613 = dma.done [#allocation19], 16
        $region112: #{tpu_custom_call.1} parent=87 // pred_fallthru
          _
        // Predicated region
        $region113: #{tpu_custom_call.1} parent=87 // pred_check
          %p614 = pneg %p281
        $region114: #{tpu_custom_call.1} parent=87 // pred_check_branch
          %616 = sbr.rel (%p614) target = $region116
        $region115: #{tpu_custom_call.1} parent=87 // pred_region
          %617 = dma.done [#allocation19], 16
        $region116: #{tpu_custom_call.1} parent=87 // pred_fallthru
          _
        // Predicated region
        $region117: #{tpu_custom_call.1} parent=87 // pred_check
          %p618 = pneg %p323
        $region118: #{tpu_custom_call.1} parent=87 // pred_check_branch
          %620 = sbr.rel (%p618) target = $region120
        $region119: #{tpu_custom_call.1} parent=87 // pred_region
          %621 = dma.done [#allocation22], 16
        $region120: #{tpu_custom_call.1} parent=87 // pred_fallthru
          _
        %s622 = smul.u32 2, %s41
        %p623 = scmp.lt.s32.totalorder %s40, 1
        %s624 = scalar_select %p623, %s40, 1
        %p625 = scmp.lt.s32.totalorder %s622, 3
        %s626 = scalar_select %p625, %s622, 3
        %s627 = smul.addr %s624, 4
        %s628 = sadd.s32 %s626, %s627
        %s629 = smul.addr %s628, 8
        %s630 = scalar_lea.vmem %s0, %s629
        %p631 = pneg %p71
        %p632 = pneg %p68
        %p633 = pneg %p92
        %p634 = pneg %p89
        %p635 = pneg %p113
        %p636 = pneg %p110
        %p637 = pneg %p134
        %p638 = pneg %p131
        %p639 = pneg %p155
        %p640 = pneg %p152
        %p641 = pneg %p176
        %p642 = pneg %p173
        %p643 = pneg %p197
        %p644 = pneg %p194
        %p645 = pneg %p218
        %p646 = pneg %p215
        %p647 = pneg %p239
        %p648 = pneg %p236
        %p649 = pneg %p260
        %p650 = pneg %p257
        %p651 = pneg %p281
        %p652 = pneg %p278
        %p653 = pneg %p302
        %p654 = pneg %p299
        %p655 = pneg %p323
        %p656 = pneg %p320
        %p657 = pneg %p344
        %p658 = pneg %p341
        %p659 = pneg %p365
        %p660 = pneg %p362
        %p661 = pneg %p386
        %p662 = pneg %p383
        %p663 = pneg %p407
        %p664 = pneg %p404
        %p665 = pneg %p435
        %p666 = pneg %p432
        %s667 = sand.u32 %s422, 1
        %s668 = scalar_lea.sflag [#allocation11], %s667
        %s669 = sand.u32 %s422, 1
        %s670 = smul.addr %s669, 16
        %s671 = scalar_lea.vmem [#allocation23], %s670
        %s672 = smul.u32 2, %s41
        %p673 = scmp.lt.s32.totalorder %s40, 1
        %s674 = scalar_select %p673, %s40, 1
        %p675 = scmp.lt.s32.totalorder %s672, 3
        %s676 = scalar_select %p675, %s672, 3
        %s677 = smul.addr %s674, 4
        %s678 = sadd.s32 %s676, %s677
        %s679 = smul.addr %s678, 8
        %s680 = scalar_lea.vmem %s0, %s679
        %s681 = smul.u32 2, %s41
        %s682 = smul.u32 2, %s41
        %p683 = scmp.eq.s32.totalorder %s41, 0
        // Predicated region
        $region121: #{tpu_custom_call.1} parent=87 // pred_check
          %p684 = pneg %p683
        $region122: #{tpu_custom_call.1} parent=87 // pred_check_branch
          %686 = sbr.rel (%p684) target = $region124
        $region123: #{tpu_custom_call.1} parent=87 // pred_region
          %vm687 = vcmask 523264
          %688 = vst.msk [vmem:[#allocation2] sm:$0xff] %vm687, 0.0
          %689 = vst.msk [vmem:[#allocation2 + $0x8] sm:$0xff] %vm687, 0.0
          %690 = vst.msk [vmem:[#allocation3] sm:$0xff] %vm687, 0.0
        $region124: #{tpu_custom_call.1} parent=87 // pred_fallthru
          _
        %v691 = vld [vmem:[%s680] sm:$0xff]
        %v692 = vld [vmem:[%s680 + $0x8] sm:$0xff]
        %v693 = vld [vmem:[#allocation9] sm:$0xff]
        %v694 = vld [vmem:[#allocation9 + $0x8] sm:$0xff]
        %v695 = vld [vmem:[#allocation9 + $0x10] sm:$0xff]
        %v696 = vld [vmem:[#allocation9 + $0x18] sm:$0xff]
        %v697 = vld [vmem:[%s2] sm:$0x1]
        %v699 = vlaneseq
        %v700 = vshrl.u32 %v699, 7
        %v701 = vsub.s32 0, %v700
        %v702 = vrot.slane %v697, %v701
        %vm704 = vcmask 261120
        %v706 = vsel %vm704, %v691, 0
        %v709 = vsel %vm704, %v692, 0
        %711 = vmatprep.subr.mxu0 0.0
        %712 = vmatpush1.msra.mxu0 %v693
        %713 = vmatprep.subr.mxu0 0.0
        %714 = vmatpush1.msra.mxu0 %v694
        %715 = vmatprep.subr.mxu0 0.0
        %716 = vmatpush1.msra.mxu0 %v695
        %717 = vmatprep.subr.mxu0 0.0
        %718 = vmatpush1.msra.mxu0 %v696
        %719 = vmatprep.subr.mxu0 0.0
        %720 = vmatpush1.msra.mxu0 0.0
        %721 = vmatprep.subr.mxu0 0.0
        %722 = vmatpush1.msra.mxu0 0.0
        %723 = vmatprep.subr.mxu0 0.0
        %724 = vmatpush1.msra.mxu0 0.0
        %725 = vmatprep.subr.mxu0 0.0
        %726 = vmatpush1.msra.mxu0 0.0
        %727 = vmatprep.subr.mxu0 0.0
        %728 = vmatpush1.msra.mxu0 0.0
        %729 = vmatprep.subr.mxu0 0.0
        %730 = vmatpush1.msra.mxu0 0.0
        %731 = vmatprep.subr.mxu0 0.0
        %732 = vmatpush1.msra.mxu0 0.0
        %733 = vmatprep.subr.mxu0 0.0
        %734 = vmatpush1.msra.mxu0 0.0
        %735 = vmatprep.subr.mxu0 0.0
        %736 = vmatpush1.msra.mxu0 0.0
        %737 = vmatprep.subr.mxu0 0.0
        %738 = vmatpush1.msra.mxu0 0.0
        %739 = vmatprep.subr.mxu0 0.0
        %740 = vmatpush1.msra.mxu0 0.0
        %741 = vmatprep.subr.mxu0 0.0
        %742 = vmatpush1.msra.mxu0 0.0
        %743 = vmatprep.subr.mxu0 0.0
        %744 = vmatpush1.msra.mxu0 0.0
        %745 = vmatprep.subr.mxu0 0.0
        %746 = vmatpush1.msra.mxu0 0.0
        %747 = vmatprep.subr.mxu0 0.0
        %748 = vmatpush1.msra.mxu0 0.0
        %749 = vmatprep.subr.mxu0 0.0
        %750 = vmatpush1.msra.mxu0 0.0
        %751 = vmatprep.subr.mxu0 0.0
        %752 = vmatpush1.msra.mxu0 0.0
        %753 = vmatprep.subr.mxu0 0.0
        %754 = vmatpush1.msra.mxu0 0.0
        %755 = vmatprep.subr.mxu0 0.0
        %756 = vmatpush1.msra.mxu0 0.0
        %757 = vmatprep.subr.mxu0 0.0
        %758 = vmatpush1.msra.mxu0 0.0
        %759 = vmatprep.subr.mxu0 0.0
        %760 = vmatpush1.msra.mxu0 0.0
        %761 = vmatprep.subr.mxu0 0.0
        %762 = vmatpush1.msra.mxu0 0.0
        %763 = vmatprep.subr.mxu0 0.0
        %764 = vmatpush1.msra.mxu0 0.0
        %765 = vmatprep.subr.mxu0 0.0
        %766 = vmatpush1.msra.mxu0 0.0
        %767 = vmatprep.subr.mxu0 0.0
        %768 = vmatpush1.msra.mxu0 0.0
        %769 = vmatprep.subr.mxu0 0.0
        %770 = vmatpush1.msra.mxu0 0.0
        %771 = vmatprep.subr.mxu0 0.0
        %772 = vmatpush1.msra.mxu0 0.0
        %773 = vmatprep.subr.mxu0 0.0
        %774 = vmatpush1.msra.mxu0 0.0
        %775 = vmatprep.mubr.f32.mxu0 0.0
        %776 = vmatmul.mubr.f32.gmra.mrb[0].mxu0 %v706
        %v777 = vpop.f32.mrb[0].mxu0
        %v778 = vadd.f32 %v702, %v777
        %v779 = vpop.f32.mrb[0].mxu0
        %780 = vmatprep.mubr.f32.mxu0 0.0
        %781 = vmatmul.mubr.f32.gmra.mrb[0].mxu0 %v709
        %v782 = vpop.f32.mrb[0].mxu0
        %v783 = vadd.f32 %v702, %v782
        %v784 = vpop.f32.mrb[0].mxu0
        %785 = vdwg.mxu0
        %v786 = vld [vmem:[#allocation12] sm:$0xff]
        %v787 = vld [vmem:[#allocation12 + $0x8] sm:$0xff]
        %v788 = vld [vmem:[#allocation12 + $0x10] sm:$0xff]
        %v789 = vld [vmem:[#allocation12 + $0x18] sm:$0xff]
        %v790 = vld [vmem:[#allocation14] sm:$0x1]
        %v792 = vlaneseq
        %v793 = vshrl.u32 %v792, 7
        %v794 = vsub.s32 0, %v793
        %v795 = vrot.slane %v790, %v794
        %797 = vmatprep.subr.mxu0 0.0
        %798 = vmatpush1.msra.mxu0 %v786
        %799 = vmatprep.subr.mxu0 0.0
        %800 = vmatpush1.msra.mxu0 %v787
        %801 = vmatprep.subr.mxu0 0.0
        %802 = vmatpush1.msra.mxu0 %v788
        %803 = vmatprep.subr.mxu0 0.0
        %804 = vmatpush1.msra.mxu0 %v789
        %805 = vmatprep.subr.mxu0 0.0
        %806 = vmatpush1.msra.mxu0 0.0
        %807 = vmatprep.subr.mxu0 0.0
        %808 = vmatpush1.msra.mxu0 0.0
        %809 = vmatprep.subr.mxu0 0.0
        %810 = vmatpush1.msra.mxu0 0.0
        %811 = vmatprep.subr.mxu0 0.0
        %812 = vmatpush1.msra.mxu0 0.0
        %813 = vmatprep.subr.mxu0 0.0
        %814 = vmatpush1.msra.mxu0 0.0
        %815 = vmatprep.subr.mxu0 0.0
        %816 = vmatpush1.msra.mxu0 0.0
        %817 = vmatprep.subr.mxu0 0.0
        %818 = vmatpush1.msra.mxu0 0.0
        %819 = vmatprep.subr.mxu0 0.0
        %820 = vmatpush1.msra.mxu0 0.0
        %821 = vmatprep.subr.mxu0 0.0
        %822 = vmatpush1.msra.mxu0 0.0
        %823 = vmatprep.subr.mxu0 0.0
        %824 = vmatpush1.msra.mxu0 0.0
        %825 = vmatprep.subr.mxu0 0.0
        %826 = vmatpush1.msra.mxu0 0.0
        %827 = vmatprep.subr.mxu0 0.0
        %828 = vmatpush1.msra.mxu0 0.0
        %829 = vmatprep.subr.mxu0 0.0
        %830 = vmatpush1.msra.mxu0 0.0
        %831 = vmatprep.subr.mxu0 0.0
        %832 = vmatpush1.msra.mxu0 0.0
        %833 = vmatprep.subr.mxu0 0.0
        %834 = vmatpush1.msra.mxu0 0.0
        %835 = vmatprep.subr.mxu0 0.0
        %836 = vmatpush1.msra.mxu0 0.0
        %837 = vmatprep.subr.mxu0 0.0
        %838 = vmatpush1.msra.mxu0 0.0
        %839 = vmatprep.subr.mxu0 0.0
        %840 = vmatpush1.msra.mxu0 0.0
        %841 = vmatprep.subr.mxu0 0.0
        %842 = vmatpush1.msra.mxu0 0.0
        %843 = vmatprep.subr.mxu0 0.0
        %844 = vmatpush1.msra.mxu0 0.0
        %845 = vmatprep.subr.mxu0 0.0
        %846 = vmatpush1.msra.mxu0 0.0
        %847 = vmatprep.subr.mxu0 0.0
        %848 = vmatpush1.msra.mxu0 0.0
        %849 = vmatprep.subr.mxu0 0.0
        %850 = vmatpush1.msra.mxu0 0.0
        %851 = vmatprep.subr.mxu0 0.0
        %852 = vmatpush1.msra.mxu0 0.0
        %853 = vmatprep.subr.mxu0 0.0
        %854 = vmatpush1.msra.mxu0 0.0
        %855 = vmatprep.subr.mxu0 0.0
        %856 = vmatpush1.msra.mxu0 0.0
        %857 = vmatprep.subr.mxu0 0.0
        %858 = vmatpush1.msra.mxu0 0.0
        %859 = vmatprep.subr.mxu0 0.0
        %860 = vmatpush1.msra.mxu0 0.0
        %861 = vmatprep.mubr.f32.mxu0 0.0
        %862 = vmatmul.mubr.f32.gmra.mrb[0].mxu0 %v706
        %v863 = vpop.f32.mrb[0].mxu0
        %v864 = vadd.f32 %v795, %v863
        %v865 = vpop.f32.mrb[0].mxu0
        %866 = vmatprep.mubr.f32.mxu0 0.0
        %867 = vmatmul.mubr.f32.gmra.mrb[0].mxu0 %v709
        %v868 = vpop.f32.mrb[0].mxu0
        %v869 = vadd.f32 %v795, %v868
        %v870 = vpop.f32.mrb[0].mxu0
        %871 = vdwg.mxu0
        %v872 = vld [vmem:[#allocation3] sm:$0xff]
        %v873 = vld [vmem:[#allocation15] sm:$0xf]
        %v874 = vld [vmem:[#allocation17] sm:$0x1]
        %v876 = vlaneseq
        %v877 = vshrl.u32 %v876, 7
        %v878 = vsub.s32 0, %v877
        %v879 = vrot.slane %v874, %v878
        %v881 = vlaneseq
        %v882 = vshrl.u32 %v881, 7
        %v883 = vsub.s32 0, %v882
        %v884 = vrot.slane %v873, %v883
        %v885 = vmul.f32 %v884, %v872
        %v886 = vmul.f32 %v884, %v778
        %v887 = vmul.f32 %v884, %v783
        %v888 = vadd.f32 %v879, %v885
        %v889 = vadd.f32 %v879, %v886
        %v890 = vadd.f32 %v879, %v887
        %v891 = vlaneseq
        %v892 = vshrl.u32 %v891, 7
        %v893 = vsub.s32 1, %v892
        %v894 = vrot.slane %v873, %v893
        %v895 = vmul.f32 %v894, %v872
        %v896 = vmul.f32 %v894, %v778
        %v897 = vmul.f32 %v894, %v783
        %vm901 = vcmask 1046528
        %v902 = vrot.slane %v895, 1
        %v903 = vrot.slane %v896, 1
        %v904 = vsel %vm901, %v902, %v903
        %v905 = vrot.slane %v897, 1
        %v906 = vsel %vm901, %v903, %v905
        %v910 = vadd.f32 %v888, %v904
        %v911 = vadd.f32 %v889, %v906
        %v912 = vadd.f32 %v890, %v905
        %v913 = vlaneseq
        %v914 = vshrl.u32 %v913, 7
        %v915 = vsub.s32 2, %v914
        %v916 = vrot.slane %v873, %v915
        %v917 = vmul.f32 %v916, %v872
        %v918 = vmul.f32 %v916, %v778
        %v919 = vmul.f32 %v916, %v783
        %vm923 = vcmask 1045504
        %v924 = vrot.slane %v917, 2
        %v925 = vrot.slane %v918, 2
        %v926 = vsel %vm923, %v924, %v925
        %v927 = vrot.slane %v919, 2
        %v928 = vsel %vm923, %v925, %v927
        %v932 = vadd.f32 %v910, %v926
        %v933 = vadd.f32 %v911, %v928
        %v934 = vadd.f32 %v912, %v927
        %v935 = vlaneseq
        %v936 = vshrl.u32 %v935, 7
        %v937 = vsub.s32 3, %v936
        %v938 = vrot.slane %v873, %v937
        %v939 = vmul.f32 %v938, %v778
        %v940 = vmul.f32 %v938, %v783
        %vm943 = vcmask 1044480
        %v944 = vrot.slane %v939, 3
        %v945 = vrot.slane %v940, 3
        %v946 = vsel %vm943, %v944, %v945
        %v950 = vadd.f32 %v932, %v944
        %v951 = vadd.f32 %v933, %v946
        %v952 = vadd.f32 %v934, %v945
        %v953 = vsub.f32 0.0, %v950
        %v954 = vsub.f32 0.0, %v951
        %v955 = vsub.f32 0.0, %v952
        %v956 = vmul.f32 %v953, 1.442695
        %v957 = vpow.pop %v956
        %v958 = vmul.f32 %v954, 1.442695
        %v959 = vpow.pop %v958
        %v960 = vmul.f32 %v955, 1.442695
        %v961 = vpow.pop %v960
        %v962 = vadd.f32 %v957, 1.0
        %v963 = vadd.f32 %v959, 1.0
        %v964 = vadd.f32 %v961, 1.0
        %v965 = vrcp.pop %v962
        %v966 = vmul.f32 1.0, %v965
        %v967 = vrcp.pop %v963
        %v968 = vmul.f32 1.0, %v967
        %v969 = vrcp.pop %v964
        %v970 = vmul.f32 1.0, %v969
        %v971 = vmul.f32 %v950, %v966
        %v972 = vmul.f32 %v951, %v968
        %v973 = vmul.f32 %v952, %v970
        %vm974 = vcmask 523269
        %975 = vst.msk [vmem:[#allocation3] sm:$0xe0] %vm974, %v783
        %v976 = vld [vmem:[%s7] sm:$0xff]
        %v977 = vld [vmem:[%s7 + $0x8] sm:$0xff]
        %v978 = vld [vmem:[%s7 + $0x10] sm:$0xff]
        %v979 = vld [vmem:[%s7 + $0x18] sm:$0xff]
        %v980 = vld [vmem:[%s7 + $0x20] sm:$0xff]
        %v981 = vld [vmem:[%s7 + $0x28] sm:$0xff]
        %v982 = vld [vmem:[%s7 + $0x30] sm:$0xff]
        %v983 = vld [vmem:[%s7 + $0x38] sm:$0xff]
        %v984 = vld [vmem:[#allocation18] sm:$0x1]
        %v986 = vlaneseq
        %v987 = vshrl.u32 %v986, 7
        %v988 = vsub.s32 0, %v987
        %v989 = vrot.slane %v984, %v988
        %vm994 = vcmask 1042432
        %v995 = vrot.slane %v971, 5
        %v996 = vrot.slane %v972, 5
        %v997 = vsel %vm994, %v995, %v996
        %v998 = vrot.slane %v973, 5
        %v999 = vsel %vm994, %v996, %v998
        %vm1000 = vcmask 523264
        %v1001 = vsel %vm1000, %v997, 0
        %v1003 = vsel %vm1000, %v999, 0
        %1005 = vmatprep.subr.mxu0 0.0
        %1006 = vmatpush1.msra.mxu0 %v976
        %1007 = vmatprep.subr.mxu0 0.0
        %1008 = vmatpush1.msra.mxu0 %v977
        %1009 = vmatprep.subr.mxu0 0.0
        %1010 = vmatpush1.msra.mxu0 %v978
        %1011 = vmatprep.subr.mxu0 0.0
        %1012 = vmatpush1.msra.mxu0 %v979
        %1013 = vmatprep.subr.mxu0 0.0
        %1014 = vmatpush1.msra.mxu0 %v980
        %1015 = vmatprep.subr.mxu0 0.0
        %1016 = vmatpush1.msra.mxu0 %v981
        %1017 = vmatprep.subr.mxu0 0.0
        %1018 = vmatpush1.msra.mxu0 %v982
        %1019 = vmatprep.subr.mxu0 0.0
        %1020 = vmatpush1.msra.mxu0 %v983
        %1021 = vmatprep.subr.mxu0 0.0
        %1022 = vmatpush1.msra.mxu0 0.0
        %1023 = vmatprep.subr.mxu0 0.0
        %1024 = vmatpush1.msra.mxu0 0.0
        %1025 = vmatprep.subr.mxu0 0.0
        %1026 = vmatpush1.msra.mxu0 0.0
        %1027 = vmatprep.subr.mxu0 0.0
        %1028 = vmatpush1.msra.mxu0 0.0
        %1029 = vmatprep.subr.mxu0 0.0
        %1030 = vmatpush1.msra.mxu0 0.0
        %1031 = vmatprep.subr.mxu0 0.0
        %1032 = vmatpush1.msra.mxu0 0.0
        %1033 = vmatprep.subr.mxu0 0.0
        %1034 = vmatpush1.msra.mxu0 0.0
        %1035 = vmatprep.subr.mxu0 0.0
        %1036 = vmatpush1.msra.mxu0 0.0
        %1037 = vmatprep.subr.mxu0 0.0
        %1038 = vmatpush1.msra.mxu0 0.0
        %1039 = vmatprep.subr.mxu0 0.0
        %1040 = vmatpush1.msra.mxu0 0.0
        %1041 = vmatprep.subr.mxu0 0.0
        %1042 = vmatpush1.msra.mxu0 0.0
        %1043 = vmatprep.subr.mxu0 0.0
        %1044 = vmatpush1.msra.mxu0 0.0
        %1045 = vmatprep.subr.mxu0 0.0
        %1046 = vmatpush1.msra.mxu0 0.0
        %1047 = vmatprep.subr.mxu0 0.0
        %1048 = vmatpush1.msra.mxu0 0.0
        %1049 = vmatprep.subr.mxu0 0.0
        %1050 = vmatpush1.msra.mxu0 0.0
        %1051 = vmatprep.subr.mxu0 0.0
        %1052 = vmatpush1.msra.mxu0 0.0
        %1053 = vmatprep.subr.mxu0 0.0
        %1054 = vmatpush1.msra.mxu0 0.0
        %1055 = vmatprep.subr.mxu0 0.0
        %1056 = vmatpush1.msra.mxu0 0.0
        %1057 = vmatprep.subr.mxu0 0.0
        %1058 = vmatpush1.msra.mxu0 0.0
        %1059 = vmatprep.subr.mxu0 0.0
        %1060 = vmatpush1.msra.mxu0 0.0
        %1061 = vmatprep.subr.mxu0 0.0
        %1062 = vmatpush1.msra.mxu0 0.0
        %1063 = vmatprep.subr.mxu0 0.0
        %1064 = vmatpush1.msra.mxu0 0.0
        %1065 = vmatprep.subr.mxu0 0.0
        %1066 = vmatpush1.msra.mxu0 0.0
        %1067 = vmatprep.subr.mxu0 0.0
        %1068 = vmatpush1.msra.mxu0 0.0
        %1069 = vmatprep.mubr.f32.mxu0 0.0
        %1070 = vmatmul.mubr.f32.gmra.mrb[0].mxu0 %v1001
        %v1071 = vpop.f32.mrb[0].mxu0
        %v1072 = vadd.f32 %v989, %v1071
        %v1073 = vpop.f32.mrb[0].mxu0
        %1074 = vmatprep.mubr.f32.mxu0 0.0
        %1075 = vmatmul.mubr.f32.gmra.mrb[0].mxu0 %v1003
        %v1076 = vpop.f32.mrb[0].mxu0
        %v1077 = vadd.f32 %v989, %v1076
        %v1078 = vpop.f32.mrb[0].mxu0
        %1079 = vdwg.mxu0
        %v1080 = vmax.f32 %v1072, 0.0
        %v1081 = vmax.f32 %v1077, 0.0
        %v1082 = vand.u32 2147483647, %v1072
        %v1083 = vand.u32 2147483647, %v1077
        %v1084 = vsub.f32 0.0, %v1082
        %v1085 = vsub.f32 0.0, %v1083
        %v1086 = vmul.f32 %v1084, 1.442695
        %v1087 = vpow.pop %v1086
        %v1088 = vmul.f32 %v1085, 1.442695
        %v1089 = vpow.pop %v1088
        %v1090 = vadd.f32 %v1087, 1.0
        %v1091 = vlog2.pop %v1090
        %v1092 = vmul.f32 %v1091, 0.6931472
        %v1093 = vmul.f32 -0.5, %v1087
        %v1094 = vadd.f32 %v1093, 1.0
        %v1095 = vmul.f32 %v1094, %v1087
        %v1096 = vand.u32 2147483647, %v1087
        %vm1097 = vcmp.lt.f32.partialorder %v1096, 0.0004427343
        %v1098 = vsel %vm1097, %v1095, %v1092
        %v1099 = vadd.f32 %v1089, 1.0
        %v1100 = vlog2.pop %v1099
        %v1101 = vmul.f32 %v1100, 0.6931472
        %v1102 = vmul.f32 -0.5, %v1089
        %v1103 = vadd.f32 %v1102, 1.0
        %v1104 = vmul.f32 %v1103, %v1089
        %v1105 = vand.u32 2147483647, %v1089
        %vm1106 = vcmp.lt.f32.partialorder %v1105, 0.0004427343
        %v1107 = vsel %vm1106, %v1104, %v1101
        %v1108 = vadd.f32 %v1080, %v1098
        %v1109 = vadd.f32 %v1081, %v1107
        %v1110 = vld [vmem:[%s9] sm:$0xff]
        %v1111 = vld [vmem:[%s9 + $0x8] sm:$0xff]
        %v1112 = vld [vmem:[%s9 + $0x10] sm:$0xff]
        %v1113 = vld [vmem:[%s9 + $0x18] sm:$0xff]
        %v1114 = vld [vmem:[%s9 + $0x20] sm:$0xff]
        %v1115 = vld [vmem:[%s9 + $0x28] sm:$0xff]
        %v1116 = vld [vmem:[%s9 + $0x30] sm:$0xff]
        %v1117 = vld [vmem:[%s9 + $0x38] sm:$0xff]
        %v1118 = vld [vmem:[#allocation20] sm:$0x1]
        %v1120 = vlaneseq
        %v1121 = vshrl.u32 %v1120, 7
        %v1122 = vsub.s32 0, %v1121
        %v1123 = vrot.slane %v1118, %v1122
        %1125 = vmatprep.subr.mxu0 0.0
        %1126 = vmatpush1.msra.mxu0 %v1110
        %1127 = vmatprep.subr.mxu0 0.0
        %1128 = vmatpush1.msra.mxu0 %v1111
        %1129 = vmatprep.subr.mxu0 0.0
        %1130 = vmatpush1.msra.mxu0 %v1112
        %1131 = vmatprep.subr.mxu0 0.0
        %1132 = vmatpush1.msra.mxu0 %v1113
        %1133 = vmatprep.subr.mxu0 0.0
        %1134 = vmatpush1.msra.mxu0 %v1114
        %1135 = vmatprep.subr.mxu0 0.0
        %1136 = vmatpush1.msra.mxu0 %v1115
        %1137 = vmatprep.subr.mxu0 0.0
        %1138 = vmatpush1.msra.mxu0 %v1116
        %1139 = vmatprep.subr.mxu0 0.0
        %1140 = vmatpush1.msra.mxu0 %v1117
        %1141 = vmatprep.subr.mxu0 0.0
        %1142 = vmatpush1.msra.mxu0 0.0
        %1143 = vmatprep.subr.mxu0 0.0
        %1144 = vmatpush1.msra.mxu0 0.0
        %1145 = vmatprep.subr.mxu0 0.0
        %1146 = vmatpush1.msra.mxu0 0.0
        %1147 = vmatprep.subr.mxu0 0.0
        %1148 = vmatpush1.msra.mxu0 0.0
        %1149 = vmatprep.subr.mxu0 0.0
        %1150 = vmatpush1.msra.mxu0 0.0
        %1151 = vmatprep.subr.mxu0 0.0
        %1152 = vmatpush1.msra.mxu0 0.0
        %1153 = vmatprep.subr.mxu0 0.0
        %1154 = vmatpush1.msra.mxu0 0.0
        %1155 = vmatprep.subr.mxu0 0.0
        %1156 = vmatpush1.msra.mxu0 0.0
        %1157 = vmatprep.subr.mxu0 0.0
        %1158 = vmatpush1.msra.mxu0 0.0
        %1159 = vmatprep.subr.mxu0 0.0
        %1160 = vmatpush1.msra.mxu0 0.0
        %1161 = vmatprep.subr.mxu0 0.0
        %1162 = vmatpush1.msra.mxu0 0.0
        %1163 = vmatprep.subr.mxu0 0.0
        %1164 = vmatpush1.msra.mxu0 0.0
        %1165 = vmatprep.subr.mxu0 0.0
        %1166 = vmatpush1.msra.mxu0 0.0
        %1167 = vmatprep.subr.mxu0 0.0
        %1168 = vmatpush1.msra.mxu0 0.0
        %1169 = vmatprep.subr.mxu0 0.0
        %1170 = vmatpush1.msra.mxu0 0.0
        %1171 = vmatprep.subr.mxu0 0.0
        %1172 = vmatpush1.msra.mxu0 0.0
        %1173 = vmatprep.subr.mxu0 0.0
        %1174 = vmatpush1.msra.mxu0 0.0
        %1175 = vmatprep.subr.mxu0 0.0
        %1176 = vmatpush1.msra.mxu0 0.0
        %1177 = vmatprep.subr.mxu0 0.0
        %1178 = vmatpush1.msra.mxu0 0.0
        %1179 = vmatprep.subr.mxu0 0.0
        %1180 = vmatpush1.msra.mxu0 0.0
        %1181 = vmatprep.subr.mxu0 0.0
        %1182 = vmatpush1.msra.mxu0 0.0
        %1183 = vmatprep.subr.mxu0 0.0
        %1184 = vmatpush1.msra.mxu0 0.0
        %1185 = vmatprep.subr.mxu0 0.0
        %1186 = vmatpush1.msra.mxu0 0.0
        %1187 = vmatprep.subr.mxu0 0.0
        %1188 = vmatpush1.msra.mxu0 0.0
        %1189 = vmatprep.mubr.f32.mxu0 0.0
        %1190 = vmatmul.mubr.f32.gmra.mrb[0].mxu0 %v1001
        %v1191 = vpop.f32.mrb[0].mxu0
        %v1192 = vadd.f32 %v1123, %v1191
        %v1193 = vpop.f32.mrb[0].mxu0
        %1194 = vmatprep.mubr.f32.mxu0 0.0
        %1195 = vmatmul.mubr.f32.gmra.mrb[0].mxu0 %v1003
        %v1196 = vpop.f32.mrb[0].mxu0
        %v1197 = vadd.f32 %v1123, %v1196
        %v1198 = vpop.f32.mrb[0].mxu0
        %1199 = vdwg.mxu0
        %v1200 = vld [vmem:[%s11] sm:$0xff]
        %v1201 = vld [vmem:[%s11 + $0x8] sm:$0xff]
        %v1202 = vld [vmem:[%s11 + $0x10] sm:$0xff]
        %v1203 = vld [vmem:[%s11 + $0x18] sm:$0xff]
        %v1204 = vld [vmem:[%s11 + $0x20] sm:$0xff]
        %v1205 = vld [vmem:[%s11 + $0x28] sm:$0xff]
        %v1206 = vld [vmem:[%s11 + $0x30] sm:$0xff]
        %v1207 = vld [vmem:[%s11 + $0x38] sm:$0xff]
        %v1208 = vld [vmem:[#allocation21] sm:$0x1]
        %v1210 = vlaneseq
        %v1211 = vshrl.u32 %v1210, 7
        %v1212 = vsub.s32 0, %v1211
        %v1213 = vrot.slane %v1208, %v1212
        %1215 = vmatprep.subr.mxu0 0.0
        %1216 = vmatpush1.msra.mxu0 %v1200
        %1217 = vmatprep.subr.mxu0 0.0
        %1218 = vmatpush1.msra.mxu0 %v1201
        %1219 = vmatprep.subr.mxu0 0.0
        %1220 = vmatpush1.msra.mxu0 %v1202
        %1221 = vmatprep.subr.mxu0 0.0
        %1222 = vmatpush1.msra.mxu0 %v1203
        %1223 = vmatprep.subr.mxu0 0.0
        %1224 = vmatpush1.msra.mxu0 %v1204
        %1225 = vmatprep.subr.mxu0 0.0
        %1226 = vmatpush1.msra.mxu0 %v1205
        %1227 = vmatprep.subr.mxu0 0.0
        %1228 = vmatpush1.msra.mxu0 %v1206
        %1229 = vmatprep.subr.mxu0 0.0
        %1230 = vmatpush1.msra.mxu0 %v1207
        %1231 = vmatprep.subr.mxu0 0.0
        %1232 = vmatpush1.msra.mxu0 0.0
        %1233 = vmatprep.subr.mxu0 0.0
        %1234 = vmatpush1.msra.mxu0 0.0
        %1235 = vmatprep.subr.mxu0 0.0
        %1236 = vmatpush1.msra.mxu0 0.0
        %1237 = vmatprep.subr.mxu0 0.0
        %1238 = vmatpush1.msra.mxu0 0.0
        %1239 = vmatprep.subr.mxu0 0.0
        %1240 = vmatpush1.msra.mxu0 0.0
        %1241 = vmatprep.subr.mxu0 0.0
        %1242 = vmatpush1.msra.mxu0 0.0
        %1243 = vmatprep.subr.mxu0 0.0
        %1244 = vmatpush1.msra.mxu0 0.0
        %1245 = vmatprep.subr.mxu0 0.0
        %1246 = vmatpush1.msra.mxu0 0.0
        %1247 = vmatprep.subr.mxu0 0.0
        %1248 = vmatpush1.msra.mxu0 0.0
        %1249 = vmatprep.subr.mxu0 0.0
        %1250 = vmatpush1.msra.mxu0 0.0
        %1251 = vmatprep.subr.mxu0 0.0
        %1252 = vmatpush1.msra.mxu0 0.0
        %1253 = vmatprep.subr.mxu0 0.0
        %1254 = vmatpush1.msra.mxu0 0.0
        %1255 = vmatprep.subr.mxu0 0.0
        %1256 = vmatpush1.msra.mxu0 0.0
        %1257 = vmatprep.subr.mxu0 0.0
        %1258 = vmatpush1.msra.mxu0 0.0
        %1259 = vmatprep.subr.mxu0 0.0
        %1260 = vmatpush1.msra.mxu0 0.0
        %1261 = vmatprep.subr.mxu0 0.0
        %1262 = vmatpush1.msra.mxu0 0.0
        %1263 = vmatprep.subr.mxu0 0.0
        %1264 = vmatpush1.msra.mxu0 0.0
        %1265 = vmatprep.subr.mxu0 0.0
        %1266 = vmatpush1.msra.mxu0 0.0
        %1267 = vmatprep.subr.mxu0 0.0
        %1268 = vmatpush1.msra.mxu0 0.0
        %1269 = vmatprep.subr.mxu0 0.0
        %1270 = vmatpush1.msra.mxu0 0.0
        %1271 = vmatprep.subr.mxu0 0.0
        %1272 = vmatpush1.msra.mxu0 0.0
        %1273 = vmatprep.subr.mxu0 0.0
        %1274 = vmatpush1.msra.mxu0 0.0
        %1275 = vmatprep.subr.mxu0 0.0
        %1276 = vmatpush1.msra.mxu0 0.0
        %1277 = vmatprep.subr.mxu0 0.0
        %1278 = vmatpush1.msra.mxu0 0.0
        %1279 = vmatprep.mubr.f32.mxu0 0.0
        %1280 = vmatmul.mubr.f32.gmra.mrb[0].mxu0 %v1001
        %v1281 = vpop.f32.mrb[0].mxu0
        %v1282 = vadd.f32 %v1213, %v1281
        %v1283 = vpop.f32.mrb[0].mxu0
        %1284 = vmatprep.mubr.f32.mxu0 0.0
        %1285 = vmatmul.mubr.f32.gmra.mrb[0].mxu0 %v1003
        %v1286 = vpop.f32.mrb[0].mxu0
        %v1287 = vadd.f32 %v1213, %v1286
        %v1288 = vpop.f32.mrb[0].mxu0
        %1289 = vdwg.mxu0
        %1290 = vst.msk [vmem:[#allocation4 - $0x5] sm:$0xe0] %vm974, %v971
        %1291 = vst.msk [vmem:[#allocation4 + $0x3] sm:$0xff] %vm1000, %v972
        %vm1292 = vcmask 520192
        %1293 = vst.msk [vmem:[#allocation4 + $0xb] sm:$0x1f] %vm1292, %v973
        %1294 = vst.msk [vmem:[#allocation5] sm:$0xff] %vm1000, %v1108
        %1295 = vst.msk [vmem:[#allocation5 + $0x8] sm:$0xff] %vm1000, %v1109
        %vm1296 = vcmask 130048
        %1297 = vst.msk [vmem:[#allocation6] sm:$0xff] %vm1296, %v1192
        %1298 = vst.msk [vmem:[#allocation6 + $0x8] sm:$0xff] %vm1296, %v1197
        %1299 = vst.msk [vmem:[#allocation7] sm:$0xff] %vm1296, %v1282
        %1300 = vst.msk [vmem:[#allocation7 + $0x8] sm:$0xff] %vm1296, %v1287
        %v1301 = vld [vmem:[%s13] sm:$0xff]
        %v1302 = vld [vmem:[%s13 + $0x8] sm:$0xff]
        %v1303 = vld [vmem:[#allocation2] sm:$0xff]
        %v1304 = vld [vmem:[#allocation2 + $0x8] sm:$0xff]
        loop: start=0, step=1, limit=2
        $region125: #{tpu_custom_call.1} parent=87 // loop_pre_header
          _
        $region126: #{tpu_custom_call.1} parent=87 // loop_header
          %s1306 = sphi 0, %s1310
          %p1307 = scmp.ge.s32.totalorder %s1306, 2
          %v1311 = vphi %v1303, %v1746
          %v1312 = vphi %v1304, %v1747
        $region127: #{tpu_custom_call.1} parent=87 // loop_header_branch
          %1309 = sbr.rel (%p1307) target = $region131
        $region128: #{tpu_custom_call.1} parent=87 // loop_body
          %s1313 = smul.u32 %s1306, 8
          %s1314 = scalar_lea.vmem [#allocation5], %s1313
          %v1315 = vld [vmem:[%s1314] sm:$0xff]
          %s1316 = scalar_lea.vmem [#allocation4], %s1313
          %v1317 = vld [vmem:[%s1316] sm:$0xff]
          %v1318 = vmul.f32 %v1315, %v1317
          %s1319 = scalar_lea.vmem [#allocation6], %s1313
          %v1320 = vld [vmem:[%s1319] sm:$0xff]
          %1321 = vxpose.xlu0.b32.start [1/16] %v1320, 128
          %1322 = vxpose.xlu0.b32.cont [2/16] 0.0, 128
          %1323 = vxpose.xlu0.b32.cont [3/16] 0.0, 128
          %1324 = vxpose.xlu0.b32.cont [4/16] 0.0, 128
          %1325 = vxpose.xlu0.b32.cont [5/16] 0.0, 128
          %1326 = vxpose.xlu0.b32.cont [6/16] 0.0, 128
          %1327 = vxpose.xlu0.b32.cont [7/16] 0.0, 128
          %1328 = vxpose.xlu0.b32.cont [8/16] 0.0, 128
          %1329 = vxpose.xlu0.b32.cont [9/16] 0.0, 128
          %1330 = vxpose.xlu0.b32.cont [10/16] 0.0, 128
          %1331 = vxpose.xlu0.b32.cont [11/16] 0.0, 128
          %1332 = vxpose.xlu0.b32.cont [12/16] 0.0, 128
          %1333 = vxpose.xlu0.b32.cont [13/16] 0.0, 128
          %1334 = vxpose.xlu0.b32.cont [14/16] 0.0, 128
          %1335 = vxpose.xlu0.b32.cont [15/16] 0.0, 128
          %1336 = vxpose.xlu0.b32.end [16/16] 0.0, 128
          %v1337 = vpop.trf.xlu0
          %v1338 = vpop.trf.xlu0
          %v1339 = vpop.trf.xlu0
          %v1340 = vpop.trf.xlu0
          %v1341 = vpop.trf.xlu0
          %v1342 = vpop.trf.xlu0
          %v1343 = vpop.trf.xlu0
          %v1344 = vpop.trf.xlu0
          %v1345 = vpop.trf.xlu0
          %v1346 = vpop.trf.xlu0
          %v1347 = vpop.trf.xlu0
          %v1348 = vpop.trf.xlu0
          %v1349 = vpop.trf.xlu0
          %v1350 = vpop.trf.xlu0
          %v1351 = vpop.trf.xlu0
          %v1352 = vpop.trf.xlu0
          %s1353 = scalar_lea.vmem [#allocation7], %s1313
          %v1354 = vld [vmem:[%s1353] sm:$0xff]
          %1355 = vxpose.xlu0.b32.start [1/16] %v1354, 128
          %1356 = vxpose.xlu0.b32.cont [2/16] 0.0, 128
          %1357 = vxpose.xlu0.b32.cont [3/16] 0.0, 128
          %1358 = vxpose.xlu0.b32.cont [4/16] 0.0, 128
          %1359 = vxpose.xlu0.b32.cont [5/16] 0.0, 128
          %1360 = vxpose.xlu0.b32.cont [6/16] 0.0, 128
          %1361 = vxpose.xlu0.b32.cont [7/16] 0.0, 128
          %1362 = vxpose.xlu0.b32.cont [8/16] 0.0, 128
          %1363 = vxpose.xlu0.b32.cont [9/16] 0.0, 128
          %1364 = vxpose.xlu0.b32.cont [10/16] 0.0, 128
          %1365 = vxpose.xlu0.b32.cont [11/16] 0.0, 128
          %1366 = vxpose.xlu0.b32.cont [12/16] 0.0, 128
          %1367 = vxpose.xlu0.b32.cont [13/16] 0.0, 128
          %1368 = vxpose.xlu0.b32.cont [14/16] 0.0, 128
          %1369 = vxpose.xlu0.b32.cont [15/16] 0.0, 128
          %1370 = vxpose.xlu0.b32.end [16/16] 0.0, 128
          %v1371 = vpop.trf.xlu0
          %v1372 = vpop.trf.xlu0
          %v1373 = vpop.trf.xlu0
          %v1374 = vpop.trf.xlu0
          %v1375 = vpop.trf.xlu0
          %v1376 = vpop.trf.xlu0
          %v1377 = vpop.trf.xlu0
          %v1378 = vpop.trf.xlu0
          %v1379 = vpop.trf.xlu0
          %v1380 = vpop.trf.xlu0
          %v1381 = vpop.trf.xlu0
          %v1382 = vpop.trf.xlu0
          %v1383 = vpop.trf.xlu0
          %v1384 = vpop.trf.xlu0
          %v1385 = vpop.trf.xlu0
          %v1386 = vpop.trf.xlu0
          %v1387 = vlaneseq
          %v1388 = vshrl.u32 %v1387, 7
          %v1389 = vsub.s32 0, %v1388
          %v1390 = vrot.slane %v1315, %v1389
          %v1391 = vmul.f32 %v1390, %v1301
          %v1392 = vmul.f32 %v1390, %v1302
          %v1393 = vmul.f32 %v1391, 1.442695
          %v1394 = vpow.pop %v1393
          %v1395 = vmul.f32 %v1392, 1.442695
          %v1396 = vpow.pop %v1395
          %1398 = vset.pattern.permute.xlu0 0
          %1399 = vperm.xlu0 %1398, %v1337
          %v1400 = vpop.permute.xlu0 %1399
          %1403 = vset.pattern.permute.xlu0 0
          %1404 = vperm.xlu0 %1403, %v1338
          %v1405 = vpop.permute.xlu0 %1404
          %v1407 = vlaneseq
          %v1408 = vshrl.u32 %v1407, 7
          %v1409 = vsub.s32 0, %v1408
          %v1410 = vrot.slane %v1318, %v1409
          %v1411 = vmul.f32 %v1400, %v1410
          %v1412 = vmul.f32 %v1405, %v1410
          %v1413 = vmul.f32 %v1394, %v1311
          %v1414 = vmul.f32 %v1396, %v1312
          %v1415 = vadd.f32 %v1413, %v1411
          %v1416 = vadd.f32 %v1414, %v1412
          %1418 = vset.pattern.permute.xlu0 0
          %1419 = vperm.xlu0 %1418, %v1371
          %v1420 = vpop.permute.xlu0 %1419
          %1423 = vset.pattern.permute.xlu0 0
          %1424 = vperm.xlu0 %1423, %v1372
          %v1425 = vpop.permute.xlu0 %1424
          %v1427 = vmul.f32 %v1415, %v1420
          %v1428 = vmul.f32 %v1416, %v1425
          %v1429 = vsel %vm1000, %v1427, 0.0
          %v1430 = vsel %vm1000, %v1428, 0.0
          %v1431 = vadd.f32 %v1429, %v1430
          %v1432 = vrot.slane %v1431, 4
          %v1433 = vadd.f32 %v1431, %v1432
          %v1434 = vrot.slane %v1433, 2
          %v1435 = vadd.f32 %v1433, %v1434
          %v1436 = vrot.slane %v1435, 1
          %v1437 = vadd.f32 %v1435, %v1436
          %v1438 = vlaneseq
          %v1439 = vshrl.u32 %v1438, 7
          %v1440 = vsub.s32 1, %v1439
          %v1441 = vrot.slane %v1315, %v1440
          %v1442 = vmul.f32 %v1441, %v1301
          %v1443 = vmul.f32 %v1441, %v1302
          %v1444 = vmul.f32 %v1442, 1.442695
          %v1445 = vpow.pop %v1444
          %v1446 = vmul.f32 %v1443, 1.442695
          %v1447 = vpow.pop %v1446
          %1448 = vset.pattern.permute.xlu0 1
          %1449 = vperm.xlu0 %1448, %v1337
          %v1450 = vpop.permute.xlu0 %1449
          %1452 = vset.pattern.permute.xlu0 1
          %1453 = vperm.xlu0 %1452, %v1338
          %v1454 = vpop.permute.xlu0 %1453
          %v1456 = vlaneseq
          %v1457 = vshrl.u32 %v1456, 7
          %v1458 = vsub.s32 1, %v1457
          %v1459 = vrot.slane %v1318, %v1458
          %v1460 = vmul.f32 %v1450, %v1459
          %v1461 = vmul.f32 %v1454, %v1459
          %v1462 = vmul.f32 %v1445, %v1415
          %v1463 = vmul.f32 %v1447, %v1416
          %v1464 = vadd.f32 %v1462, %v1460
          %v1465 = vadd.f32 %v1463, %v1461
          %1466 = vset.pattern.permute.xlu0 1
          %1467 = vperm.xlu0 %1466, %v1371
          %v1468 = vpop.permute.xlu0 %1467
          %1470 = vset.pattern.permute.xlu0 1
          %1471 = vperm.xlu0 %1470, %v1372
          %v1472 = vpop.permute.xlu0 %1471
          %v1474 = vmul.f32 %v1464, %v1468
          %v1475 = vmul.f32 %v1465, %v1472
          %v1476 = vsel %vm1000, %v1474, 0.0
          %v1477 = vsel %vm1000, %v1475, 0.0
          %v1478 = vadd.f32 %v1476, %v1477
          %v1479 = vrot.slane %v1478, 4
          %v1480 = vadd.f32 %v1478, %v1479
          %v1481 = vrot.slane %v1480, 2
          %v1482 = vadd.f32 %v1480, %v1481
          %v1483 = vrot.slane %v1482, 1
          %v1484 = vadd.f32 %v1482, %v1483
          %v1485 = vlaneseq
          %v1486 = vshrl.u32 %v1485, 7
          %v1487 = vsub.s32 2, %v1486
          %v1488 = vrot.slane %v1315, %v1487
          %v1489 = vmul.f32 %v1488, %v1301
          %v1490 = vmul.f32 %v1488, %v1302
          %v1491 = vmul.f32 %v1489, 1.442695
          %v1492 = vpow.pop %v1491
          %v1493 = vmul.f32 %v1490, 1.442695
          %v1494 = vpow.pop %v1493
          %1495 = vset.pattern.permute.xlu0 2
          %1496 = vperm.xlu0 %1495, %v1337
          %v1497 = vpop.permute.xlu0 %1496
          %1499 = vset.pattern.permute.xlu0 2
          %1500 = vperm.xlu0 %1499, %v1338
          %v1501 = vpop.permute.xlu0 %1500
          %v1503 = vlaneseq
          %v1504 = vshrl.u32 %v1503, 7
          %v1505 = vsub.s32 2, %v1504
          %v1506 = vrot.slane %v1318, %v1505
          %v1507 = vmul.f32 %v1497, %v1506
          %v1508 = vmul.f32 %v1501, %v1506
          %v1509 = vmul.f32 %v1492, %v1464
          %v1510 = vmul.f32 %v1494, %v1465
          %v1511 = vadd.f32 %v1509, %v1507
          %v1512 = vadd.f32 %v1510, %v1508
          %1513 = vset.pattern.permute.xlu0 2
          %1514 = vperm.xlu0 %1513, %v1371
          %v1515 = vpop.permute.xlu0 %1514
          %1517 = vset.pattern.permute.xlu0 2
          %1518 = vperm.xlu0 %1517, %v1372
          %v1519 = vpop.permute.xlu0 %1518
          %v1521 = vmul.f32 %v1511, %v1515
          %v1522 = vmul.f32 %v1512, %v1519
          %v1523 = vsel %vm1000, %v1521, 0.0
          %v1524 = vsel %vm1000, %v1522, 0.0
          %v1525 = vadd.f32 %v1523, %v1524
          %v1526 = vrot.slane %v1525, 4
          %v1527 = vadd.f32 %v1525, %v1526
          %v1528 = vrot.slane %v1527, 2
          %v1529 = vadd.f32 %v1527, %v1528
          %v1530 = vrot.slane %v1529, 1
          %v1531 = vadd.f32 %v1529, %v1530
          %v1532 = vlaneseq
          %v1533 = vshrl.u32 %v1532, 7
          %v1534 = vsub.s32 3, %v1533
          %v1535 = vrot.slane %v1315, %v1534
          %v1536 = vmul.f32 %v1535, %v1301
          %v1537 = vmul.f32 %v1535, %v1302
          %v1538 = vmul.f32 %v1536, 1.442695
          %v1539 = vpow.pop %v1538
          %v1540 = vmul.f32 %v1537, 1.442695
          %v1541 = vpow.pop %v1540
          %1542 = vset.pattern.permute.xlu0 3
          %1543 = vperm.xlu0 %1542, %v1337
          %v1544 = vpop.permute.xlu0 %1543
          %1546 = vset.pattern.permute.xlu0 3
          %1547 = vperm.xlu0 %1546, %v1338
          %v1548 = vpop.permute.xlu0 %1547
          %v1550 = vlaneseq
          %v1551 = vshrl.u32 %v1550, 7
          %v1552 = vsub.s32 3, %v1551
          %v1553 = vrot.slane %v1318, %v1552
          %v1554 = vmul.f32 %v1544, %v1553
          %v1555 = vmul.f32 %v1548, %v1553
          %v1556 = vmul.f32 %v1539, %v1511
          %v1557 = vmul.f32 %v1541, %v1512
          %v1558 = vadd.f32 %v1556, %v1554
          %v1559 = vadd.f32 %v1557, %v1555
          %1560 = vset.pattern.permute.xlu0 3
          %1561 = vperm.xlu0 %1560, %v1371
          %v1562 = vpop.permute.xlu0 %1561
          %1564 = vset.pattern.permute.xlu0 3
          %1565 = vperm.xlu0 %1564, %v1372
          %v1566 = vpop.permute.xlu0 %1565
          %v1568 = vmul.f32 %v1558, %v1562
          %v1569 = vmul.f32 %v1559, %v1566
          %v1570 = vsel %vm1000, %v1568, 0.0
          %v1571 = vsel %vm1000, %v1569, 0.0
          %v1572 = vadd.f32 %v1570, %v1571
          %v1573 = vrot.slane %v1572, 4
          %v1574 = vadd.f32 %v1572, %v1573
          %v1575 = vrot.slane %v1574, 2
          %v1576 = vadd.f32 %v1574, %v1575
          %v1577 = vrot.slane %v1576, 1
          %v1578 = vadd.f32 %v1576, %v1577
          %v1579 = vlaneseq
          %v1580 = vshrl.u32 %v1579, 7
          %v1581 = vsub.s32 4, %v1580
          %v1582 = vrot.slane %v1315, %v1581
          %v1583 = vmul.f32 %v1582, %v1301
          %v1584 = vmul.f32 %v1582, %v1302
          %v1585 = vmul.f32 %v1583, 1.442695
          %v1586 = vpow.pop %v1585
          %v1587 = vmul.f32 %v1584, 1.442695
          %v1588 = vpow.pop %v1587
          %1589 = vset.pattern.permute.xlu0 4
          %1590 = vperm.xlu0 %1589, %v1337
          %v1591 = vpop.permute.xlu0 %1590
          %1593 = vset.pattern.permute.xlu0 4
          %1594 = vperm.xlu0 %1593, %v1338
          %v1595 = vpop.permute.xlu0 %1594
          %v1597 = vlaneseq
          %v1598 = vshrl.u32 %v1597, 7
          %v1599 = vsub.s32 4, %v1598
          %v1600 = vrot.slane %v1318, %v1599
          %v1601 = vmul.f32 %v1591, %v1600
          %v1602 = vmul.f32 %v1595, %v1600
          %v1603 = vmul.f32 %v1586, %v1558
          %v1604 = vmul.f32 %v1588, %v1559
          %v1605 = vadd.f32 %v1603, %v1601
          %v1606 = vadd.f32 %v1604, %v1602
          %1607 = vset.pattern.permute.xlu0 4
          %1608 = vperm.xlu0 %1607, %v1371
          %v1609 = vpop.permute.xlu0 %1608
          %1611 = vset.pattern.permute.xlu0 4
          %1612 = vperm.xlu0 %1611, %v1372
          %v1613 = vpop.permute.xlu0 %1612
          %v1615 = vmul.f32 %v1605, %v1609
          %v1616 = vmul.f32 %v1606, %v1613
          %v1617 = vsel %vm1000, %v1615, 0.0
          %v1618 = vsel %vm1000, %v1616, 0.0
          %v1619 = vadd.f32 %v1617, %v1618
          %v1620 = vrot.slane %v1619, 4
          %v1621 = vadd.f32 %v1619, %v1620
          %v1622 = vrot.slane %v1621, 2
          %v1623 = vadd.f32 %v1621, %v1622
          %v1624 = vrot.slane %v1623, 1
          %v1625 = vadd.f32 %v1623, %v1624
          %v1626 = vlaneseq
          %v1627 = vshrl.u32 %v1626, 7
          %v1628 = vsub.s32 5, %v1627
          %v1629 = vrot.slane %v1315, %v1628
          %v1630 = vmul.f32 %v1629, %v1301
          %v1631 = vmul.f32 %v1629, %v1302
          %v1632 = vmul.f32 %v1630, 1.442695
          %v1633 = vpow.pop %v1632
          %v1634 = vmul.f32 %v1631, 1.442695
          %v1635 = vpow.pop %v1634
          %1636 = vset.pattern.permute.xlu0 5
          %1637 = vperm.xlu0 %1636, %v1337
          %v1638 = vpop.permute.xlu0 %1637
          %1640 = vset.pattern.permute.xlu0 5
          %1641 = vperm.xlu0 %1640, %v1338
          %v1642 = vpop.permute.xlu0 %1641
          %v1644 = vlaneseq
          %v1645 = vshrl.u32 %v1644, 7
          %v1646 = vsub.s32 5, %v1645
          %v1647 = vrot.slane %v1318, %v1646
          %v1648 = vmul.f32 %v1638, %v1647
          %v1649 = vmul.f32 %v1642, %v1647
          %v1650 = vmul.f32 %v1633, %v1605
          %v1651 = vmul.f32 %v1635, %v1606
          %v1652 = vadd.f32 %v1650, %v1648
          %v1653 = vadd.f32 %v1651, %v1649
          %1654 = vset.pattern.permute.xlu0 5
          %1655 = vperm.xlu0 %1654, %v1371
          %v1656 = vpop.permute.xlu0 %1655
          %1658 = vset.pattern.permute.xlu0 5
          %1659 = vperm.xlu0 %1658, %v1372
          %v1660 = vpop.permute.xlu0 %1659
          %v1662 = vmul.f32 %v1652, %v1656
          %v1663 = vmul.f32 %v1653, %v1660
          %v1664 = vsel %vm1000, %v1662, 0.0
          %v1665 = vsel %vm1000, %v1663, 0.0
          %v1666 = vadd.f32 %v1664, %v1665
          %v1667 = vrot.slane %v1666, 4
          %v1668 = vadd.f32 %v1666, %v1667
          %v1669 = vrot.slane %v1668, 2
          %v1670 = vadd.f32 %v1668, %v1669
          %v1671 = vrot.slane %v1670, 1
          %v1672 = vadd.f32 %v1670, %v1671
          %v1673 = vlaneseq
          %v1674 = vshrl.u32 %v1673, 7
          %v1675 = vsub.s32 6, %v1674
          %v1676 = vrot.slane %v1315, %v1675
          %v1677 = vmul.f32 %v1676, %v1301
          %v1678 = vmul.f32 %v1676, %v1302
          %v1679 = vmul.f32 %v1677, 1.442695
          %v1680 = vpow.pop %v1679
          %v1681 = vmul.f32 %v1678, 1.442695
          %v1682 = vpow.pop %v1681
          %1683 = vset.pattern.permute.xlu0 6
          %1684 = vperm.xlu0 %1683, %v1337
          %v1685 = vpop.permute.xlu0 %1684
          %1687 = vset.pattern.permute.xlu0 6
          %1688 = vperm.xlu0 %1687, %v1338
          %v1689 = vpop.permute.xlu0 %1688
          %v1691 = vlaneseq
          %v1692 = vshrl.u32 %v1691, 7
          %v1693 = vsub.s32 6, %v1692
          %v1694 = vrot.slane %v1318, %v1693
          %v1695 = vmul.f32 %v1685, %v1694
          %v1696 = vmul.f32 %v1689, %v1694
          %v1697 = vmul.f32 %v1680, %v1652
          %v1698 = vmul.f32 %v1682, %v1653
          %v1699 = vadd.f32 %v1697, %v1695
          %v1700 = vadd.f32 %v1698, %v1696
          %1701 = vset.pattern.permute.xlu0 6
          %1702 = vperm.xlu0 %1701, %v1371
          %v1703 = vpop.permute.xlu0 %1702
          %1705 = vset.pattern.permute.xlu0 6
          %1706 = vperm.xlu0 %1705, %v1372
          %v1707 = vpop.permute.xlu0 %1706
          %v1709 = vmul.f32 %v1699, %v1703
          %v1710 = vmul.f32 %v1700, %v1707
          %v1711 = vsel %vm1000, %v1709, 0.0
          %v1712 = vsel %vm1000, %v1710, 0.0
          %v1713 = vadd.f32 %v1711, %v1712
          %v1714 = vrot.slane %v1713, 4
          %v1715 = vadd.f32 %v1713, %v1714
          %v1716 = vrot.slane %v1715, 2
          %v1717 = vadd.f32 %v1715, %v1716
          %v1718 = vrot.slane %v1717, 1
          %v1719 = vadd.f32 %v1717, %v1718
          %v1720 = vlaneseq
          %v1721 = vshrl.u32 %v1720, 7
          %v1722 = vsub.s32 7, %v1721
          %v1723 = vrot.slane %v1315, %v1722
          %v1724 = vmul.f32 %v1723, %v1301
          %v1725 = vmul.f32 %v1723, %v1302
          %v1726 = vmul.f32 %v1724, 1.442695
          %v1727 = vpow.pop %v1726
          %v1728 = vmul.f32 %v1725, 1.442695
          %v1729 = vpow.pop %v1728
          %1730 = vset.pattern.permute.xlu0 7
          %1731 = vperm.xlu0 %1730, %v1337
          %v1732 = vpop.permute.xlu0 %1731
          %1734 = vset.pattern.permute.xlu0 7
          %1735 = vperm.xlu0 %1734, %v1338
          %v1736 = vpop.permute.xlu0 %1735
          %v1738 = vlaneseq
          %v1739 = vshrl.u32 %v1738, 7
          %v1740 = vsub.s32 7, %v1739
          %v1741 = vrot.slane %v1318, %v1740
          %v1742 = vmul.f32 %v1732, %v1741
          %v1743 = vmul.f32 %v1736, %v1741
          %v1744 = vmul.f32 %v1727, %v1699
          %v1745 = vmul.f32 %v1729, %v1700
          %v1746 = vadd.f32 %v1744, %v1742
          %v1747 = vadd.f32 %v1745, %v1743
          %1748 = vset.pattern.permute.xlu0 7
          %1749 = vperm.xlu0 %1748, %v1371
          %v1750 = vpop.permute.xlu0 %1749
          %1752 = vset.pattern.permute.xlu0 7
          %1753 = vperm.xlu0 %1752, %v1372
          %v1754 = vpop.permute.xlu0 %1753
          %v1756 = vmul.f32 %v1746, %v1750
          %v1757 = vmul.f32 %v1747, %v1754
          %v1758 = vsel %vm1000, %v1756, 0.0
          %v1759 = vsel %vm1000, %v1757, 0.0
          %v1760 = vadd.f32 %v1758, %v1759
          %v1761 = vrot.slane %v1760, 4
          %v1762 = vadd.f32 %v1760, %v1761
          %v1763 = vrot.slane %v1762, 2
          %v1764 = vadd.f32 %v1762, %v1763
          %v1765 = vrot.slane %v1764, 1
          %v1766 = vadd.f32 %v1764, %v1765
          %vm1767 = vcmask 1040384
          %v1768 = vsel %vm1767, %v1437, %v1484
          %vm1769 = vcmask 1041408
          %v1770 = vsel %vm1769, %v1768, %v1531
          %v1771 = vsel %vm994, %v1770, %v1578
          %vm1772 = vcmask 1043456
          %v1773 = vsel %vm1772, %v1771, %v1625
          %v1774 = vsel %vm943, %v1773, %v1672
          %v1775 = vsel %vm923, %v1774, %v1719
          %v1776 = vsel %vm901, %v1775, %v1766
          %s1777 = scalar_lea.vmem [#allocation8], %s1313
          %1778 = vst.msk [vmem:[%s1777] sm:$0xff] %vm1000, %v1776
        $region129: #{tpu_custom_call.1} parent=87 // loop_footer
          %s1310 = sadd.s32 1, %s1306
        $region130: #{tpu_custom_call.1} parent=87 // loop_footer_branch
          %1305 = sbr.rel target = $region126
        $region131: #{tpu_custom_call.1} parent=87 // loop_exit
          _
        %1779 = vst.msk [vmem:[#allocation2] sm:$0xff] %vm1000, %v1311
        %1780 = vst.msk [vmem:[#allocation2 + $0x8] sm:$0xff] %vm1000, %v1312
        %v1781 = vld [vmem:[#allocation8] sm:$0xff]
        %v1782 = vld [vmem:[#allocation8 + $0x8] sm:$0xff]
        %v1783 = vld [vmem:[%s14] sm:$0x1]
        %v1785 = vlaneseq
        %v1786 = vshrl.u32 %v1785, 7
        %v1787 = vsub.s32 0, %v1786
        %v1788 = vrot.slane %v1783, %v1787
        %v1790 = vmul.f32 %v1788, %v971
        %v1791 = vmul.f32 %v1788, %v972
        %v1792 = vmul.f32 %v1788, %v973
        %v1796 = vrot.slane %v1790, 5
        %v1797 = vrot.slane %v1791, 5
        %v1798 = vsel %vm994, %v1796, %v1797
        %v1799 = vrot.slane %v1792, 5
        %v1800 = vsel %vm994, %v1797, %v1799
        %v1803 = vadd.f32 %v1781, %v1798
        %v1804 = vadd.f32 %v1782, %v1800
        %v1805 = vsub.f32 0.0, %v864
        %v1806 = vsub.f32 0.0, %v869
        %v1807 = vmul.f32 %v1805, 1.442695
        %v1808 = vpow.pop %v1807
        %v1809 = vmul.f32 %v1806, 1.442695
        %v1810 = vpow.pop %v1809
        %v1811 = vadd.f32 %v1808, 1.0
        %v1812 = vadd.f32 %v1810, 1.0
        %v1813 = vrcp.pop %v1811
        %v1814 = vmul.f32 1.0, %v1813
        %v1815 = vrcp.pop %v1812
        %v1816 = vmul.f32 1.0, %v1815
        %v1817 = vmul.f32 %v864, %v1814
        %v1818 = vmul.f32 %v869, %v1816
        %v1819 = vmul.f32 %v1803, %v1817
        %v1820 = vmul.f32 %v1804, %v1818
        %v1821 = vld [vmem:[%s15] sm:$0xff]
        %v1822 = vld [vmem:[%s15 + $0x8] sm:$0xff]
        %v1823 = vld [vmem:[%s15 + $0x10] sm:$0xff]
        %v1824 = vld [vmem:[%s15 + $0x18] sm:$0xff]
        %v1825 = vld [vmem:[%s15 + $0x20] sm:$0xff]
        %v1826 = vld [vmem:[%s15 + $0x28] sm:$0xff]
        %v1827 = vld [vmem:[%s15 + $0x30] sm:$0xff]
        %v1828 = vld [vmem:[%s15 + $0x38] sm:$0xff]
        %v1829 = vld [vmem:[%s16] sm:$0x1]
        %v1831 = vlaneseq
        %v1832 = vshrl.u32 %v1831, 7
        %v1833 = vsub.s32 0, %v1832
        %v1834 = vrot.slane %v1829, %v1833
        %v1837 = vsel %vm1000, %v1819, 0
        %v1840 = vsel %vm1000, %v1820, 0
        %1842 = vmatprep.subr.mxu0 0.0
        %1843 = vmatpush1.msra.mxu0 %v1821
        %1844 = vmatprep.subr.mxu0 0.0
        %1845 = vmatpush1.msra.mxu0 %v1822
        %1846 = vmatprep.subr.mxu0 0.0
        %1847 = vmatpush1.msra.mxu0 %v1823
        %1848 = vmatprep.subr.mxu0 0.0
        %1849 = vmatpush1.msra.mxu0 %v1824
        %1850 = vmatprep.subr.mxu0 0.0
        %1851 = vmatpush1.msra.mxu0 %v1825
        %1852 = vmatprep.subr.mxu0 0.0
        %1853 = vmatpush1.msra.mxu0 %v1826
        %1854 = vmatprep.subr.mxu0 0.0
        %1855 = vmatpush1.msra.mxu0 %v1827
        %1856 = vmatprep.subr.mxu0 0.0
        %1857 = vmatpush1.msra.mxu0 %v1828
        %1858 = vmatprep.subr.mxu0 0.0
        %1859 = vmatpush1.msra.mxu0 0.0
        %1860 = vmatprep.subr.mxu0 0.0
        %1861 = vmatpush1.msra.mxu0 0.0
        %1862 = vmatprep.subr.mxu0 0.0
        %1863 = vmatpush1.msra.mxu0 0.0
        %1864 = vmatprep.subr.mxu0 0.0
        %1865 = vmatpush1.msra.mxu0 0.0
        %1866 = vmatprep.subr.mxu0 0.0
        %1867 = vmatpush1.msra.mxu0 0.0
        %1868 = vmatprep.subr.mxu0 0.0
        %1869 = vmatpush1.msra.mxu0 0.0
        %1870 = vmatprep.subr.mxu0 0.0
        %1871 = vmatpush1.msra.mxu0 0.0
        %1872 = vmatprep.subr.mxu0 0.0
        %1873 = vmatpush1.msra.mxu0 0.0
        %1874 = vmatprep.subr.mxu0 0.0
        %1875 = vmatpush1.msra.mxu0 0.0
        %1876 = vmatprep.subr.mxu0 0.0
        %1877 = vmatpush1.msra.mxu0 0.0
        %1878 = vmatprep.subr.mxu0 0.0
        %1879 = vmatpush1.msra.mxu0 0.0
        %1880 = vmatprep.subr.mxu0 0.0
        %1881 = vmatpush1.msra.mxu0 0.0
        %1882 = vmatprep.subr.mxu0 0.0
        %1883 = vmatpush1.msra.mxu0 0.0
        %1884 = vmatprep.subr.mxu0 0.0
        %1885 = vmatpush1.msra.mxu0 0.0
        %1886 = vmatprep.subr.mxu0 0.0
        %1887 = vmatpush1.msra.mxu0 0.0
        %1888 = vmatprep.subr.mxu0 0.0
        %1889 = vmatpush1.msra.mxu0 0.0
        %1890 = vmatprep.subr.mxu0 0.0
        %1891 = vmatpush1.msra.mxu0 0.0
        %1892 = vmatprep.subr.mxu0 0.0
        %1893 = vmatpush1.msra.mxu0 0.0
        %1894 = vmatprep.subr.mxu0 0.0
        %1895 = vmatpush1.msra.mxu0 0.0
        %1896 = vmatprep.subr.mxu0 0.0
        %1897 = vmatpush1.msra.mxu0 0.0
        %1898 = vmatprep.subr.mxu0 0.0
        %1899 = vmatpush1.msra.mxu0 0.0
        %1900 = vmatprep.subr.mxu0 0.0
        %1901 = vmatpush1.msra.mxu0 0.0
        %1902 = vmatprep.subr.mxu0 0.0
        %1903 = vmatpush1.msra.mxu0 0.0
        %1904 = vmatprep.subr.mxu0 0.0
        %1905 = vmatpush1.msra.mxu0 0.0
        %1906 = vmatprep.mubr.f32.mxu0 0.0
        %1907 = vmatmul.mubr.f32.gmra.mrb[0].mxu0 %v1837
        %v1908 = vpop.f32.mrb[0].mxu0
        %v1909 = vadd.f32 %v1834, %v1908
        %v1910 = vpop.f32.mrb[0].mxu0
        %1911 = vmatprep.mubr.f32.mxu0 0.0
        %1912 = vmatmul.mubr.f32.gmra.mrb[0].mxu0 %v1840
        %v1913 = vpop.f32.mrb[0].mxu0
        %v1914 = vadd.f32 %v1834, %v1913
        %v1915 = vpop.f32.mrb[0].mxu0
        %1916 = vdwg.mxu0
        %1917 = vst [vmem:[%s671] sm:$0xff] %v1909
        %1918 = vst [vmem:[%s671 + $0x8] sm:$0xff] %v1914
        %s1919 = sand.u32 %s422, 1
        %s1920 = scalar_lea.sflag [#allocation11], %s1919
        %s1921 = sand.u32 %s422, 1
        %s1922 = smul.addr %s1921, 16
        %s1923 = scalar_lea.vmem [#allocation23], %s1922
        // Predicated region
        $region132: #{tpu_custom_call.1} parent=87 // pred_check
          %p1924 = pneg %p432
        $region133: #{tpu_custom_call.1} parent=87 // pred_check_branch
          %1926 = sbr.rel (%p1924) target = $region135
        $region134: #{tpu_custom_call.1} parent=87 // pred_region
          %s1927 = smul.u32 2, %s41
          %s1929 = ssub.s32 256, 256
          %1930 = vsyncadd %s1920, %s1929
          %s1931 = smul.addr %s40, 4
          %s1932 = sadd.s32 %s1927, %s1931
          %s1933 = smul.addr %s1932, 128
          %s1934 = scalar_lea.hbm %s17, %s1933
          %s1935 = sshll.u32 %s1923, 4
          %s1936 = int_to_ptr.vmem [resolvable:$true] %s1935
          %1941 = dma.vmem_to_hbm [thread:$0]  %s1936, 256, %s1934, %s1920, 128, 128, 8
        $region135: #{tpu_custom_call.1} parent=87 // pred_fallthru
          _
      $region88: #{tpu_custom_call.1} parent=5 // pred_fallthru
        _
      %p1942 = scmp.le.s32.totalorder 2, %s31
      // Predicated region
      $region136: #{tpu_custom_call.1} parent=5 // pred_check
        %p1943 = pneg %p1942
      $region137: #{tpu_custom_call.1} parent=5 // pred_check_branch
        %1945 = sbr.rel (%p1943) target = $region139
      $region138: #{tpu_custom_call.1} parent=5 // pred_region
        %s1946 = ssub.s32 %s31, 2
        // Predicated region
        $region140: #{tpu_custom_call.1} parent=138 // pred_check
          %p1947 = pneg %p438
        $region141: #{tpu_custom_call.1} parent=138 // pred_check_branch
          %1949 = sbr.rel (%p1947) target = $region143
        $region142: #{tpu_custom_call.1} parent=138 // pred_region
          %s1950 = sand.u32 %s423, 1
          %s1951 = scalar_lea.sflag [#allocation11], %s1950
          %s1952 = sand.u32 %s423, 1
          %s1953 = smul.addr %s1952, 16
          %s1954 = scalar_lea.vmem [#allocation23], %s1953
          %1955 = dma.done %s1951, 256
        $region143: #{tpu_custom_call.1} parent=138 // pred_fallthru
          _
      $region139: #{tpu_custom_call.1} parent=5 // pred_fallthru
        _
    $region6: #{tpu_custom_call.1} parent=1 // loop_footer
      %s35 = sadd.s32 1, %s31
    $region7: #{tpu_custom_call.1} parent=1 // loop_footer_branch
      %30 = sbr.rel target = $region3
    $region8: #{tpu_custom_call.1} parent=1 // loop_exit
      _
    %1956 = vsyncpa [#allocation10], 1
    %s1957 = scalar_lea.sflag [#allocation10], 1
    %1958 = vsyncpa %s1957, 1
    %1959 = vsyncpa [#allocation13], 1
    %1960 = vsyncpa [#allocation16], 1
    %1961 = vsyncpa [#allocation19], 1
    %1962 = vsyncpa [#allocation22], 1
    %1963 = vsyncpa [#allocation11], 1
    %s1964 = scalar_lea.sflag [#allocation11], 1
    %1965 = vsyncpa %s1964, 1

</llo_original>
